<compile_context>
chip_gen: v5e
topology: v5e:2x2
jax: 0.10.0
libtpu: 0.0.40
codegen_flags: <defaults>
</compile_context>

<pallas_src>
import functools

import jax
import jax.numpy as jnp
from jax import lax
from jax.experimental import pallas as pl
from jax.experimental.pallas import tpu as pltpu

# MagFace hyper-parameters (defaults from the MagFace repo args)
L_MARGIN = 0.45
U_MARGIN = 0.80
L_A = 10.0
U_A = 110.0
ARC_SCALE = 64.0
USE_ARCFACE = True            # args.arc
LOGITS_DTYPE = jnp.float32    # module returns f32 logits; bf16 halves writeback if allowed

_MIB = 1024 * 1024


def _cdiv(a, b):
    return -(-a // b)


def _round_up(a, m):
    return _cdiv(a, m) * m


def _physical_vmem_bytes():
    try:
        info = pltpu.get_tpu_info()
        v = getattr(info, "vmem_capacity_bytes", None)
        if v:
            return int(v)
    except Exception:
        pass
    return 64 * _MIB   # conservative fallback: v7x per-TensorCore VMEM


def _vmem_limit(nbytes):
    # Generation-aware scoped-VMEM budget: 2x headroom over the block estimate,
    # capped at ~55% of physical VMEM (leaves room for compiler scratch/sems).
    cap = max(int(0.55 * _physical_vmem_bytes()), 24 * _MIB)
    limit = int(min(max(2 * nbytes, 16 * _MIB), cap))
    return max(limit, int(1.25 * nbytes))   # never starve the kernel itself


def _tile_and_pad(dim, preferred):
    """Pick a 128-multiple tile <= ~preferred and the padded dim it divides.

    Never falls back to a full-width block for non-aligned dims; instead pads
    `dim` up to tile * n_tiles with minimal padding."""
    preferred = max(128, (preferred // 128) * 128)
    n = _cdiv(_round_up(dim, 128), preferred)
    tile = _round_up(_cdiv(dim, n), 128)
    return tile, tile * n, n


def _batch_tile(batch, max_tile=128):
    """Batch tile: multiple of 16 (bf16 sublane packing), capped at max_tile."""
    tb = min(_round_up(max(batch, 1), 16), max_tile)
    tb = _round_up(tb, 16)
    b_pad = _round_up(batch, tb)
    return tb, b_pad, b_pad // tb


# ---------------------------------------------------------------------------
# Kernel 1: feature embedding (stand-in for the iresnet backbone) fused with
# all batch-only MagFace math: row norm, clamp, adaptive-margin trig, x_hat.
# Grid = (batch tiles [parallel], reduction tiles [arbitrary]) with a per-tile
# f32 accumulator scratch and pl.when init/finalize.
# TODO(synk): full iresnet18/34/50/100 backbone is not replicated; a single
#             linear projection (flattened image -> embedding) stands in for it.
# ---------------------------------------------------------------------------
def _feature_norm_kernel(x_ref, w_ref, xhat_ref, side_ref, acc_ref):
    k = pl.program_id(1)

    @pl.when(k == 0)
    def _():
        acc_ref[...] = jnp.zeros_like(acc_ref)

    # bf16 MXU inputs (x cast per tile from its native dtype, w stored bf16),
    # f32 accumulation.
    acc_ref[...] += jnp.dot(
        x_ref[...].astype(jnp.bfloat16),
        w_ref[...],
        preferred_element_type=jnp.float32,
    )

    @pl.when(k == pl.num_programs(1) - 1)
    def _():
        emb = acc_ref[...]                                      # (TB, E) f32
        sumsq = jnp.sum(emb * emb, axis=1, keepdims=True)       # (TB, 1)
        raw_norm = jnp.sqrt(sumsq)
        # torch.norm(x, dim=1, keepdim=True).clamp(l_a, u_a)
        x_norm = jnp.clip(raw_norm, L_A, U_A)
        # F.normalize(x, dim=1); rsqrt runs on the EUP.
        inv_norm = lax.rsqrt(jnp.maximum(sumsq, 1e-24))
        xhat_ref[...] = (emb * inv_norm).astype(jnp.bfloat16)
        # self._margin(x_norm) -> cos/sin once per row for the whole batch.
        ada = (U_MARGIN - L_MARGIN) / (U_A - L_A) * (x_norm - L_A) + L_MARGIN
        cos_m = jnp.cos(ada)
        sin_m = jnp.sin(ada)
        # Pack the three per-row scalars into one lane-dense (TB, 128) store:
        # lane 0 = x_norm, lane 1 = cos(margin), lane 2 = sin(margin).
        lane = lax.broadcasted_iota(jnp.int32, side_ref.shape, 1)
        side = jnp.where(lane == 0, x_norm, 0.0)
        side = jnp.where(lane == 1, cos_m, side)
        side = jnp.where(lane == 2, sin_m, side)
        side_ref[...] = side


def feature_and_norm(x_flat, w_feat, *, tb, tk):
    Bp, Kp = x_flat.shape
    Kp2, E = w_feat.shape
    assert Kp == Kp2 and Bp % tb == 0 and Kp % tk == 0
    n_b, n_k = Bp // tb, Kp // tk

    x_bytes = jnp.dtype(x_flat.dtype).itemsize
    blk_bytes = (2 * (tb * tk * x_bytes + tk * E * 2)    # double-buffered inputs
                 + tb * E * 4                            # accumulator scratch
                 + 2 * (tb * E * 2 + tb * 128 * 4))      # outputs (double-buffered)

    return pl.pallas_call(
        _feature_norm_kernel,
        out_shape=(
            jax.ShapeDtypeStruct((Bp, E), jnp.bfloat16),   # x_hat (normalized emb)
            jax.ShapeDtypeStruct((Bp, 128), jnp.float32),  # packed x_norm/cos_m/sin_m
        ),
        grid_spec=pltpu.PrefetchScalarGridSpec(
            num_scalar_prefetch=0,
            grid=(n_b, n_k),
            in_specs=[
                pl.BlockSpec((tb, tk), lambda b, k: (b, k)),   # image tile (native dtype)
                pl.BlockSpec((tk, E), lambda b, k: (k, 0)),    # projection tile (bf16)
            ],
            out_specs=(
                pl.BlockSpec((tb, E), lambda b, k: (b, 0)),
                pl.BlockSpec((tb, 128), lambda b, k: (b, 0)),
            ),
            scratch_shapes=[pltpu.VMEM((tb, E), jnp.float32)],
        ),
        compiler_params=pltpu.CompilerParams(
            dimension_semantics=("parallel", "arbitrary"),   # batch || , reduction seq
            vmem_limit_bytes=_vmem_limit(blk_bytes),
        ),
    )(x_flat, w_feat)


# ---------------------------------------------------------------------------
# Kernel 2: MagFace head. Batch-only math arrives pre-packed in `side`; the
# class axis streams wide bf16 weight tiles (read exactly once: class axis is
# the outer grid dim, batch tiles inner). No revisited outputs -> both axes
# megacore-parallel.
# ---------------------------------------------------------------------------
def _maghead_kernel(xhat_ref, side_ref, w_ref, cos_out, cosm_out):
    xhat = xhat_ref[...]                        # (TB, E) bf16, precomputed
    w = w_ref[...]                              # (E, TN) bf16

    # F.normalize(weight, dim=0): column sumsq in f32 (only place we up-cast),
    # then fold 1/||w_col|| into the matmul *result* (O(B*TN) instead of O(E*TN)).
    wf = w.astype(jnp.float32)
    w_sumsq = jnp.sum(wf * wf, axis=0, keepdims=True)            # (1, TN)
    inv_wnorm = lax.rsqrt(jnp.maximum(w_sumsq, 1e-24))           # EUP

    raw = jnp.dot(xhat, w, preferred_element_type=jnp.float32)   # MXU, bf16 in / f32 acc
    cos_theta = jnp.clip(raw * inv_wnorm, -1.0, 1.0)
    sin_theta = jnp.sqrt(jnp.maximum(1.0 - cos_theta * cos_theta, 0.0))

    side = side_ref[...]                        # (TB, 128): [x_norm, cos_m, sin_m, ...]
    cos_m = side[:, 1:2]                        # (TB, 1)
    sin_m = side[:, 2:3]
    cos_theta_m = cos_theta * cos_m - sin_theta * sin_m
    if USE_ARCFACE:
        # TODO(synk): easy-margin gate (cos > 0) as in ParallelMagLinear with
        # useArcFace=True; hard-margin variant would gate on cos > cos(pi - m).
        cos_theta_m = jnp.where(cos_theta > 0.0, cos_theta_m, cos_theta)

    cos_out[...] = (ARC_SCALE * cos_theta).astype(cos_out.dtype)
    cosm_out[...] = (ARC_SCALE * cos_theta_m).astype(cosm_out.dtype)


def mag_head(x_hat, side, w_fc, *, tb, tn):
    Bp, E = x_hat.shape
    E2, Np = w_fc.shape
    assert E == E2 and Bp % tb == 0 and Np % tn == 0
    n_b, n_j = Bp // tb, Np // tn

    out_bytes = jnp.dtype(LOGITS_DTYPE).itemsize
    blk_bytes = (2 * (tb * E * 2 + tb * 128 * 4 + E * tn * 2)   # db inputs
                 + 2 * 2 * tb * tn * out_bytes)                 # db output tiles

    return pl.pallas_call(
        _maghead_kernel,
        out_shape=(
            jax.ShapeDtypeStruct((Bp, Np), LOGITS_DTYPE),   # scale * cos_theta
            jax.ShapeDtypeStruct((Bp, Np), LOGITS_DTYPE),   # scale * cos_theta_m
        ),
        grid_spec=pltpu.PrefetchScalarGridSpec(
            num_scalar_prefetch=0,
            grid=(n_j, n_b),                                 # class outer, batch inner
            in_specs=[
                pl.BlockSpec((tb, E), lambda j, b: (b, 0)),    # x_hat tile (bf16, small)
                pl.BlockSpec((tb, 128), lambda j, b: (b, 0)),  # packed margin trig
                pl.BlockSpec((E, tn), lambda j, b: (0, j)),    # class-weight tile (bf16)
            ],
            out_specs=(
                pl.BlockSpec((tb, tn), lambda j, b: (b, j)),
                pl.BlockSpec((tb, tn), lambda j, b: (b, j)),
            ),
        ),
        compiler_params=pltpu.CompilerParams(
            dimension_semantics=("parallel", "parallel"),   # no revisited output
            vmem_limit_bytes=_vmem_limit(blk_bytes),
        ),
    )(x_hat, side, w_fc)


# ---------------------------------------------------------------------------
# MagFaceBuilder.forward
# ---------------------------------------------------------------------------
def magface_forward(x_img, target, params, *, tk=2048, tn=2048):
    del target  # target is not used inside the PyTorch forward either
    B = x_img.shape[0]
    x_flat = x_img.reshape(B, -1)                      # keep native dtype (no f32 copy)
    K = x_flat.shape[1]

    # Weights consumed in bf16 (no-op cast if already stored bf16).
    w_feat = params["w_feat"].astype(jnp.bfloat16)     # (K, E)
    w_fc = params["w_fc"].astype(jnp.bfloat16)         # (E, N)
    E, N = w_feat.shape[1], w_fc.shape[1]
    assert w_feat.shape[0] == K and w_fc.shape[0] == E

    tb, B_pad, _ = _batch_tile(B)
    tk, K_pad, _ = _tile_and_pad(K, tk)
    tn, N_pad, _ = _tile_and_pad(N, tn)

    # Zero padding: padded batch rows give emb=0 (x_hat=0, norm clamps to l_a);
    # padded K columns contribute 0 to the matmul; padded classes give cos=0.
    if (B_pad, K_pad) != (B, K):
        x_flat = jnp.pad(x_flat, ((0, B_pad - B), (0, K_pad - K)))
    if K_pad != K:
        w_feat = jnp.pad(w_feat, ((0, K_pad - K), (0, 0)))
    if N_pad != N:
        w_fc = jnp.pad(w_fc, ((0, 0), (0, N_pad - N)))

    x_hat, side = feature_and_norm(x_flat, w_feat, tb=tb, tk=tk)
    # TODO(synk): ts.distributed.gather(x, dim=0) is an identity on one device.
    cos_theta, cos_theta_m = mag_head(x_hat, side, w_fc, tb=tb, tn=tn)

    x_norm = side[:B, 0:1]
    logits = (cos_theta[:B, :N], cos_theta_m[:B, :N])  # ParallelMagLinear -> both branches
    return logits, x_norm


# Pure-JAX reference with the module's formulation (normalize W then matmul),
# same bf16 precision contract, for validation.
def _reference_forward(x_img, params):
    B = x_img.shape[0]
    x_flat = x_img.reshape(B, -1)
    w_feat = params["w_feat"].astype(jnp.bfloat16)
    w_fc32 = params["w_fc"].astype(jnp.float32)

    emb = jnp.dot(x_flat.astype(jnp.bfloat16), w_feat,
                  preferred_element_type=jnp.float32)
    raw_norm = jnp.linalg.norm(emb, axis=1, keepdims=True)
    x_norm = jnp.clip(raw_norm, L_A, U_A)
    x_hat = (emb / jnp.maximum(raw_norm, 1e-12)).astype(jnp.bfloat16)

    w_hat = (w_fc32 / jnp.maximum(
        jnp.linalg.norm(w_fc32, axis=0, keepdims=True), 1e-12)).astype(jnp.bfloat16)
    cos_theta = jnp.clip(
        jnp.dot(x_hat, w_hat, preferred_element_type=jnp.float32), -1.0, 1.0)

    ada = (U_MARGIN - L_MARGIN) / (U_A - L_A) * (x_norm - L_A) + L_MARGIN
    sin_theta = jnp.sqrt(jnp.maximum(1.0 - cos_theta * cos_theta, 0.0))
    cos_theta_m = cos_theta * jnp.cos(ada) - sin_theta * jnp.sin(ada)
    if USE_ARCFACE:
        cos_theta_m = jnp.where(cos_theta > 0.0, cos_theta_m, cos_theta)
    return (ARC_SCALE * cos_theta, ARC_SCALE * cos_theta_m), x_norm


if __name__ == "__main__":
    # Small, module-consistent shapes.
    B, C, H, W = 8, 3, 16, 16          # input images, NCHW
    EMB = 128                          # args.embedding_size
    NCLS = 1024                        # args.last_fc_size

    key = jax.random.PRNGKey(0)
    k_x, k_wf, k_wc, k_t = jax.random.split(key, 4)

    x_img = jax.random.normal(k_x, (B, C, H, W), dtype=jnp.float32)
    target = jax.random.randint(k_t, (B,), 0, NCLS, dtype=jnp.int32)

    # Parameters stored bf16 (weights are streamed bf16 by the kernels):
    #   feature projection stand-in : (C*H*W, EMB), scaled so x_norm lands in [l_a, u_a]
    #   ParallelMagLinear weight    : (EMB, NCLS), uniform(-1, 1) like the repo
    params = {
        "w_feat": (0.1 * jax.random.normal(
            k_wf, (C * H * W, EMB), dtype=jnp.float32)).astype(jnp.bfloat16),
        "w_fc": jax.random.uniform(
            k_wc, (EMB, NCLS), minval=-1.0, maxval=1.0,
            dtype=jnp.float32).astype(jnp.bfloat16),
    }

    fwd = jax.jit(functools.partial(magface_forward, params=params))
    (cos_t, cos_tm), x_norm = jax.block_until_ready(fwd(x_img, target))

    # shape / range sanity
    assert cos_t.shape == (B, NCLS) and cos_tm.shape == (B, NCLS)
    assert x_norm.shape == (B, 1)
    assert bool(jnp.all(x_norm >= L_A)) and bool(jnp.all(x_norm <= U_A))
    assert bool(jnp.all(jnp.isfinite(cos_t))) and bool(jnp.all(jnp.isfinite(cos_tm)))

    # numeric check vs. the pure-JAX reference (same bf16 precision contract).
    (ref_ct, ref_ctm), ref_norm = _reference_forward(x_img, params)
    assert bool(jnp.max(jnp.abs(x_norm - ref_norm)) < 1e-2)
    assert bool(jnp.max(jnp.abs(cos_t - ref_ct)) < 0.15)        # max abs on scale-64 logits
    assert bool(jnp.mean(jnp.abs(cos_t - ref_ct)) < 0.02)       # mean abs (catches epilogue bugs)
    # Margin branch: ignore positions where |cos| ~ 0 — there the easy-margin
    # gate may legitimately flip between two equally valid bf16 roundings.
    gate_safe = jnp.abs(ref_ct) > (5e-3 * ARC_SCALE)
    diff_m = jnp.where(gate_safe, jnp.abs(cos_tm - ref_ctm), 0.0)
    assert bool(jnp.max(diff_m) < 0.2)

    print("KERNEL_OK")
</pallas_src>

<mosaic_0001>
module attributes {stable_mosaic.version = 11 : i64} {
  func.func @_feature_norm_kernel(%arg0: i32, %arg1: i32, %arg2: memref<16x768xf32, #tpu.memory_space<vmem>>, %arg3: memref<768x128xbf16, #tpu.memory_space<vmem>>, %arg4: memref<16x128xbf16, #tpu.memory_space<vmem>>, %arg5: memref<16x128xf32, #tpu.memory_space<vmem>>, %arg6: memref<16x128xf32, #tpu.memory_space<vmem>>) attributes {dimension_semantics = [#tpu.dimension_semantics<parallel>, #tpu.dimension_semantics<arbitrary>], iteration_bounds = array<i64: 1, 1>, scalar_prefetch = 0 : i64, scratch_operands = 1 : i64, tpu.core_type = #tpu.core_type<tc>, window_params = [{transform_indices = @transform_0, window_bounds = array<i64: 16, 768>}, {transform_indices = @transform_1, window_bounds = array<i64: 768, 128>}, {transform_indices = @transform_2, window_bounds = array<i64: 16, 128>}, {transform_indices = @transform_3, window_bounds = array<i64: 16, 128>}]} {
    %c0_i32 = arith.constant 0 : i32
    %0 = arith.cmpi eq, %arg1, %c0_i32 : i32
    %1 = arith.extui %0 : i1 to i32
    %c0_i32_0 = arith.constant 0 : i32
    %2 = arith.cmpi ne, %1, %c0_i32_0 : i32
    scf.if %2 {
      %cst_10 = arith.constant 0.000000e+00 : f32
      %13 = vector.broadcast %cst_10 : f32 to vector<16x128xf32>
      %c0_11 = arith.constant 0 : index
      %c0_12 = arith.constant 0 : index
      %14 = vector.load %arg6[%c0_11, %c0_12] : memref<16x128xf32, #tpu.memory_space<vmem>>, vector<16x128xf32>
      tpu.vector_store %arg6[%c0_11, %c0_12], %13 {strides = array<i32>} : memref<16x128xf32, #tpu.memory_space<vmem>>, vector<16x128xf32>,
    } else {
    }
    %c0 = arith.constant 0 : index
    %c0_1 = arith.constant 0 : index
    %3 = vector.load %arg6[%c0, %c0_1] : memref<16x128xf32, #tpu.memory_space<vmem>>, vector<16x128xf32>
    %c0_2 = arith.constant 0 : index
    %c0_3 = arith.constant 0 : index
    %4 = vector.load %arg2[%c0_2, %c0_3] : memref<16x768xf32, #tpu.memory_space<vmem>>, vector<16x768xf32>
    %5 = arith.truncf %4 : vector<16x768xf32> to vector<16x768xbf16>
    %c0_4 = arith.constant 0 : index
    %c0_5 = arith.constant 0 : index
    %6 = vector.load %arg3[%c0_4, %c0_5] : memref<768x128xbf16, #tpu.memory_space<vmem>>, vector<768x128xbf16>
    %cst = arith.constant dense<0.000000e+00> : vector<16x128xf32>
    %7 = tpu.matmul %5, %6, %cst {dimension_numbers = #tpu.dot_dimension_numbers<[1], [0], [0], [1], [0, 0, 1, 1], [], []>} : vector<16x768xbf16>, vector<768x128xbf16>, vector<16x128xf32> -> vector<16x128xf32>
    %8 = arith.addf %3, %7 : vector<16x128xf32>
    %c0_6 = arith.constant 0 : index
    %c0_7 = arith.constant 0 : index
    %9 = vector.load %arg6[%c0_6, %c0_7] : memref<16x128xf32, #tpu.memory_space<vmem>>, vector<16x128xf32>
    tpu.vector_store %arg6[%c0_6, %c0_7], %8 {strides = array<i32>} : memref<16x128xf32, #tpu.memory_space<vmem>>, vector<16x128xf32>,
    %c0_i32_8 = arith.constant 0 : i32
    %10 = arith.cmpi eq, %arg1, %c0_i32_8 : i32
    %11 = arith.extui %10 : i1 to i32
    %c0_i32_9 = arith.constant 0 : i32
    %12 = arith.cmpi ne, %11, %c0_i32_9 : i32
    scf.if %12 {
      %c0_10 = arith.constant 0 : index
      %c0_11 = arith.constant 0 : index
      %13 = vector.load %arg6[%c0_10, %c0_11] : memref<16x128xf32, #tpu.memory_space<vmem>>, vector<16x128xf32>
      %14 = arith.mulf %13, %13 : vector<16x128xf32>
      %cst_12 = arith.constant dense<0.000000e+00> : vector<16xf32>
      %15 = vector.multi_reduction <add>, %14, %cst_12 [1] : vector<16x128xf32> to vector<16xf32>
      %16 = vector.shape_cast %15 : vector<16xf32> to vector<16x1xf32>
      %17 = math.sqrt %16 : vector<16x1xf32>
      %cst_13 = arith.constant 1.000000e+01 : f32
      %cst_14 = arith.constant 1.100000e+02 : f32
      %18 = vector.broadcast %cst_13 : f32 to vector<16x1xf32>
      %19 = arith.maximumf %18, %17 : vector<16x1xf32>
      %20 = vector.broadcast %cst_14 : f32 to vector<16x1xf32>
      %21 = arith.minimumf %20, %19 : vector<16x1xf32>
      %cst_15 = arith.constant 1.000000e-24 : f32
      %22 = vector.broadcast %cst_15 : f32 to vector<16x1xf32>
      %23 = arith.maximumf %16, %22 : vector<16x1xf32>
      %24 = math.rsqrt %23 : vector<16x1xf32>
      %25 = vector.broadcast %24 : vector<16x1xf32> to vector<16x128xf32>
      %26 = arith.mulf %13, %25 : vector<16x128xf32>
      %27 = arith.truncf %26 : vector<16x128xf32> to vector<16x128xbf16>
      %c0_16 = arith.constant 0 : index
      %c0_17 = arith.constant 0 : index
      %28 = vector.load %arg4[%c0_16, %c0_17] : memref<16x128xbf16, #tpu.memory_space<vmem>>, vector<16x128xbf16>
      tpu.vector_store %arg4[%c0_16, %c0_17], %27 {strides = array<i32>} : memref<16x128xbf16, #tpu.memory_space<vmem>>, vector<16x128xbf16>,
      %cst_18 = arith.constant 1.000000e+01 : f32
      %29 = vector.broadcast %cst_18 : f32 to vector<16x1xf32>
      %30 = arith.subf %21, %29 : vector<16x1xf32>
      %cst_19 = arith.constant 3.500000e-03 : f32
      %31 = vector.broadcast %cst_19 : f32 to vector<16x1xf32>
      %32 = arith.mulf %31, %30 : vector<16x1xf32>
      %cst_20 = arith.constant 4.500000e-01 : f32
      %33 = vector.broadcast %cst_20 : f32 to vector<16x1xf32>
      %34 = arith.addf %32, %33 : vector<16x1xf32>
      %35 = math.cos %34 : vector<16x1xf32>
      %36 = math.sin %34 : vector<16x1xf32>
      %37 = tpu.iota {dimensions = array<i32: 1>} : vector<16x128xi32>
      %c0_i32_21 = arith.constant 0 : i32
      %38 = vector.broadcast %c0_i32_21 : i32 to vector<16x128xi32>
      %39 = arith.cmpi eq, %37, %38 : vector<16x128xi32>
      %cst_22 = arith.constant 0.000000e+00 : f32
      %40 = vector.shape_cast %21 : vector<16x1xf32> to vector<16x1xf32>
      %41 = vector.broadcast %40 : vector<16x1xf32> to vector<16x128xf32>
      %42 = vector.broadcast %cst_22 : f32 to vector<16x128xf32>
      %43 = arith.select %39, %41, %42 : vector<16x128xi1>, vector<16x128xf32>
      %c1_i32 = arith.constant 1 : i32
      %44 = vector.broadcast %c1_i32 : i32 to vector<16x128xi32>
      %45 = arith.cmpi eq, %37, %44 : vector<16x128xi32>
      %46 = vector.shape_cast %35 : vector<16x1xf32> to vector<16x1xf32>
      %47 = vector.broadcast %46 : vector<16x1xf32> to vector<16x128xf32>
      %48 = arith.select %45, %47, %43 : vector<16x128xi1>, vector<16x128xf32>
      %c2_i32 = arith.constant 2 : i32
      %49 = vector.broadcast %c2_i32 : i32 to vector<16x128xi32>
      %50 = arith.cmpi eq, %37, %49 : vector<16x128xi32>
      %51 = vector.shape_cast %36 : vector<16x1xf32> to vector<16x1xf32>
      %52 = vector.broadcast %51 : vector<16x1xf32> to vector<16x128xf32>
      %53 = arith.select %50, %52, %48 : vector<16x128xi1>, vector<16x128xf32>
      %c0_23 = arith.constant 0 : index
      %c0_24 = arith.constant 0 : index
      %54 = vector.load %arg5[%c0_23, %c0_24] : memref<16x128xf32, #tpu.memory_space<vmem>>, vector<16x128xf32>
      tpu.vector_store %arg5[%c0_23, %c0_24], %53 {strides = array<i32>} : memref<16x128xf32, #tpu.memory_space<vmem>>, vector<16x128xf32>,
    } else {
    }
    return
  }
  func.func @transform_0(%arg0: i32, %arg1: i32) -> (i32, i32) {
    %c0_i32 = arith.constant 0 : i32
    return %arg0, %arg1 : i32, i32
  }
  func.func @transform_1(%arg0: i32, %arg1: i32) -> (i32, i32) {
    %c0_i32 = arith.constant 0 : i32
    %c0_i32_0 = arith.constant 0 : i32
    return %arg1, %c0_i32 : i32, i32
  }
  func.func @transform_2(%arg0: i32, %arg1: i32) -> (i32, i32) {
    %c0_i32 = arith.constant 0 : i32
    %c0_i32_0 = arith.constant 0 : i32
    return %arg0, %c0_i32 : i32, i32
  }
  func.func @transform_3(%arg0: i32, %arg1: i32) -> (i32, i32) {
    %c0_i32 = arith.constant 0 : i32
    %c0_i32_0 = arith.constant 0 : i32
    return %arg0, %c0_i32 : i32, i32
  }
}

module attributes {stable_mosaic.version = 11 : i64} {
  func.func @_maghead_kernel(%arg0: i32, %arg1: i32, %arg2: memref<16x128xbf16, #tpu.memory_space<vmem>>, %arg3: memref<16x128xf32, #tpu.memory_space<vmem>>, %arg4: memref<128x1024xbf16, #tpu.memory_space<vmem>>, %arg5: memref<16x1024xf32, #tpu.memory_space<vmem>>, %arg6: memref<16x1024xf32, #tpu.memory_space<vmem>>) attributes {dimension_semantics = [#tpu.dimension_semantics<parallel>, #tpu.dimension_semantics<parallel>], iteration_bounds = array<i64: 1, 1>, scalar_prefetch = 0 : i64, scratch_operands = 0 : i64, tpu.core_type = #tpu.core_type<tc>, window_params = [{transform_indices = @transform_0, window_bounds = array<i64: 16, 128>}, {transform_indices = @transform_1, window_bounds = array<i64: 16, 128>}, {transform_indices = @transform_2, window_bounds = array<i64: 128, 1024>}, {transform_indices = @transform_3, window_bounds = array<i64: 16, 1024>}, {transform_indices = @transform_4, window_bounds = array<i64: 16, 1024>}]} {
    %c0 = arith.constant 0 : index
    %c0_0 = arith.constant 0 : index
    %0 = vector.load %arg2[%c0, %c0_0] : memref<16x128xbf16, #tpu.memory_space<vmem>>, vector<16x128xbf16>
    %c0_1 = arith.constant 0 : index
    %c0_2 = arith.constant 0 : index
    %1 = vector.load %arg4[%c0_1, %c0_2] : memref<128x1024xbf16, #tpu.memory_space<vmem>>, vector<128x1024xbf16>
    %2 = arith.extf %1 : vector<128x1024xbf16> to vector<128x1024xf32>
    %3 = arith.mulf %2, %2 : vector<128x1024xf32>
    %cst = arith.constant dense<0.000000e+00> : vector<1024xf32>
    %4 = vector.multi_reduction <add>, %3, %cst [0] : vector<128x1024xf32> to vector<1024xf32>
    %5 = vector.shape_cast %4 : vector<1024xf32> to vector<1x1024xf32>
    %cst_3 = arith.constant 1.000000e-24 : f32
    %6 = vector.broadcast %cst_3 : f32 to vector<1x1024xf32>
    %7 = arith.maximumf %5, %6 : vector<1x1024xf32>
    %8 = math.rsqrt %7 : vector<1x1024xf32>
    %cst_4 = arith.constant dense<0.000000e+00> : vector<16x1024xf32>
    %9 = tpu.matmul %0, %1, %cst_4 {dimension_numbers = #tpu.dot_dimension_numbers<[1], [0], [0], [1], [0, 0, 1, 1], [], []>} : vector<16x128xbf16>, vector<128x1024xbf16>, vector<16x1024xf32> -> vector<16x1024xf32>
    %10 = vector.broadcast %8 : vector<1x1024xf32> to vector<16x1024xf32>
    %11 = arith.mulf %9, %10 : vector<16x1024xf32>
    %cst_5 = arith.constant -1.000000e+00 : f32
    %cst_6 = arith.constant 1.000000e+00 : f32
    %12 = vector.broadcast %cst_5 : f32 to vector<16x1024xf32>
    %13 = arith.maximumf %12, %11 : vector<16x1024xf32>
    %14 = vector.broadcast %cst_6 : f32 to vector<16x1024xf32>
    %15 = arith.minimumf %14, %13 : vector<16x1024xf32>
    %16 = arith.mulf %15, %15 : vector<16x1024xf32>
    %cst_7 = arith.constant 1.000000e+00 : f32
    %17 = vector.broadcast %cst_7 : f32 to vector<16x1024xf32>
    %18 = arith.subf %17, %16 : vector<16x1024xf32>
    %cst_8 = arith.constant 0.000000e+00 : f32
    %19 = vector.broadcast %cst_8 : f32 to vector<16x1024xf32>
    %20 = arith.maximumf %18, %19 : vector<16x1024xf32>
    %21 = math.sqrt %20 : vector<16x1024xf32>
    %c0_9 = arith.constant 0 : index
    %c0_10 = arith.constant 0 : index
    %22 = vector.load %arg3[%c0_9, %c0_10] : memref<16x128xf32, #tpu.memory_space<vmem>>, vector<16x128xf32>
    %23 = vector.extract_strided_slice %22 {offsets = [0, 1], sizes = [16, 1], strides = [1, 1]} : vector<16x128xf32> to vector<16x1xf32>
    %24 = vector.extract_strided_slice %22 {offsets = [0, 2], sizes = [16, 1], strides = [1, 1]} : vector<16x128xf32> to vector<16x1xf32>
    %25 = vector.broadcast %23 : vector<16x1xf32> to vector<16x1024xf32>
    %26 = arith.mulf %15, %25 : vector<16x1024xf32>
    %27 = vector.broadcast %24 : vector<16x1xf32> to vector<16x1024xf32>
    %28 = arith.mulf %21, %27 : vector<16x1024xf32>
    %29 = arith.subf %26, %28 : vector<16x1024xf32>
    %cst_11 = arith.constant 0.000000e+00 : f32
    %30 = vector.broadcast %cst_11 : f32 to vector<16x1024xf32>
    %31 = arith.cmpf ogt, %15, %30 : vector<16x1024xf32>
    %32 = arith.select %31, %29, %15 : vector<16x1024xi1>, vector<16x1024xf32>
    %cst_12 = arith.constant 6.400000e+01 : f32
    %33 = vector.broadcast %cst_12 : f32 to vector<16x1024xf32>
    %34 = arith.mulf %33, %15 : vector<16x1024xf32>
    %c0_13 = arith.constant 0 : index
    %c0_14 = arith.constant 0 : index
    %35 = vector.load %arg5[%c0_13, %c0_14] : memref<16x1024xf32, #tpu.memory_space<vmem>>, vector<16x1024xf32>
    tpu.vector_store %arg5[%c0_13, %c0_14], %34 {strides = array<i32>} : memref<16x1024xf32, #tpu.memory_space<vmem>>, vector<16x1024xf32>,
    %cst_15 = arith.constant 6.400000e+01 : f32
    %36 = vector.broadcast %cst_15 : f32 to vector<16x1024xf32>
    %37 = arith.mulf %36, %32 : vector<16x1024xf32>
    %c0_16 = arith.constant 0 : index
    %c0_17 = arith.constant 0 : index
    %38 = vector.load %arg6[%c0_16, %c0_17] : memref<16x1024xf32, #tpu.memory_space<vmem>>, vector<16x1024xf32>
    tpu.vector_store %arg6[%c0_16, %c0_17], %37 {strides = array<i32>} : memref<16x1024xf32, #tpu.memory_space<vmem>>, vector<16x1024xf32>,
    return
  }
  func.func @transform_0(%arg0: i32, %arg1: i32) -> (i32, i32) {
    %c0_i32 = arith.constant 0 : i32
    %c0_i32_0 = arith.constant 0 : i32
    return %arg1, %c0_i32 : i32, i32
  }
  func.func @transform_1(%arg0: i32, %arg1: i32) -> (i32, i32) {
    %c0_i32 = arith.constant 0 : i32
    %c0_i32_0 = arith.constant 0 : i32
    return %arg1, %c0_i32 : i32, i32
  }
  func.func @transform_2(%arg0: i32, %arg1: i32) -> (i32, i32) {
    %c0_i32 = arith.constant 0 : i32
    %c0_i32_0 = arith.constant 0 : i32
    return %c0_i32, %arg0 : i32, i32
  }
  func.func @transform_3(%arg0: i32, %arg1: i32) -> (i32, i32) {
    %c0_i32 = arith.constant 0 : i32
    return %arg1, %arg0 : i32, i32
  }
  func.func @transform_4(%arg0: i32, %arg1: i32) -> (i32, i32) {
    %c0_i32 = arith.constant 0 : i32
    return %arg1, %arg0 : i32, i32
  }
}

</mosaic_0001>

<llo_original>
// kernel: magface_forward.2
$region0: #{magface_forward.2}
  #allocation0 [shape = 'u32[]', space=smem, size = 0x4, offset = 0x4, fixed_abs, tag = 'smem constant byte address 0x4 - core index']
  #allocation1 [shape = 'u32[72,128]{1,0:T(1,128)}', space=vmem, size = 0x9000, scoped, tag = 'internal scratch']
  #allocation2 [shape = 'f32[16,128]{1,0:T(8,128)}', space=vmem, size = 0x2000, scoped, tag = 'scratch operand']
  %s0 = inlined_call_operand.vmem [shape: f32[16,768], index: 0, kind: input, shape index: {}]
  %s1 = inlined_call_operand.hbm [shape: bf16[768,128], index: 1, kind: input, shape index: {}]
  %s2 = inlined_call_operand.vmem [shape: bf16[16,128], index: 2, kind: output, shape index: {0}]
  %s3 = inlined_call_operand.vmem [shape: f32[16,128], index: 3, kind: output, shape index: {1}]
  %4 = xla_tuple %s2, %s3
  %s5 = sld [smem:[#allocation0]]
  $region38: #{magface_forward.2} parent=0
    _
  %s7 = ssub.s32 1, %s5
  %s8 = scalar_select 0, %s7, %s5
  $region1: #{magface_forward.2} parent=0
    #allocation3 [shape = 'u8[196608]{0}', space=vmem, size = 0x30000, scoped, tag = 'input window, operand 1, single buffered']
    #allocation4 [shape = 's32[1]{0}', space=sflag, size = 0x4, scoped, tag = 'scoped memory for magface_forward.2']
    %9 = vsyncpa [#allocation4], 0
    // Predicated region
    $region2: #{magface_forward.2} parent=1 // pred_check
      _
    $region3: #{magface_forward.2} parent=1 // pred_check_branch
      %11 = sbr.rel (0) target = $region5
    $region4: #{magface_forward.2} parent=1 // pred_region
      _
    $region5: #{magface_forward.2} parent=1 // pred_fallthru
      _
    // Predicated region
    $region6: #{magface_forward.2} parent=1 // pred_check
      _
    $region7: #{magface_forward.2} parent=1 // pred_check_branch
      %13 = sbr.rel (0) target = $region9
    $region8: #{magface_forward.2} parent=1 // pred_region
      %15 = vsyncadd [#allocation4], 0
      %s16 = sshll.u32 %s1, 4
      %s17 = int_to_ptr.hbm [resolvable:$true] %s16
      %s18 = sshll.u32 [#allocation3], 4
      %s19 = int_to_ptr.vmem [resolvable:$true] %s18
      %24 = dma.hbm_to_vmem [thread:$0]  %s17, 6144, %s19, [#allocation4], 64, 64, 4
    $region9: #{magface_forward.2} parent=1 // pred_fallthru
      _
    // Predicated region
    $region10: #{magface_forward.2} parent=1 // pred_check
      _
    $region11: #{magface_forward.2} parent=1 // pred_check_branch
      %26 = sbr.rel (0) target = $region13
    $region12: #{magface_forward.2} parent=1 // pred_region
      %28 = dma.done [#allocation4], 6144
    $region13: #{magface_forward.2} parent=1 // pred_fallthru
      _
    %p29 = scmp.eq.s32.totalorder 0, 0
    // Predicated region
    $region14: #{magface_forward.2} parent=1 // pred_check
      %p30 = pneg %p29
    $region15: #{magface_forward.2} parent=1 // pred_check_branch
      %32 = sbr.rel (%p30) target = $region17
    $region16: #{magface_forward.2} parent=1 // pred_region
      %33 = vst [vmem:[#allocation2] sm:$0xff] 0.0
      %34 = vst [vmem:[#allocation2 + $0x8] sm:$0xff] 0.0
    $region17: #{magface_forward.2} parent=1 // pred_fallthru
      _
    %v35 = vld [vmem:[#allocation2] sm:$0xff]
    %v36 = vld [vmem:[#allocation2 + $0x8] sm:$0xff]
    %v37 = vld [vmem:[%s0] sm:$0xff]
    %v38 = vld [vmem:[%s0 + $0x8] sm:$0xff]
    %v39 = vld [vmem:[%s0 + $0x10] sm:$0xff]
    %v40 = vld [vmem:[%s0 + $0x18] sm:$0xff]
    %v41 = vld [vmem:[%s0 + $0x20] sm:$0xff]
    %v42 = vld [vmem:[%s0 + $0x28] sm:$0xff]
    %v43 = vld [vmem:[%s0 + $0x30] sm:$0xff]
    %v44 = vld [vmem:[%s0 + $0x38] sm:$0xff]
    %v45 = vld [vmem:[%s0 + $0x40] sm:$0xff]
    %v46 = vld [vmem:[%s0 + $0x48] sm:$0xff]
    %v47 = vld [vmem:[%s0 + $0x50] sm:$0xff]
    %v48 = vld [vmem:[%s0 + $0x58] sm:$0xff]
    %v49 = vpack.c.bf16 %v43, %v37
    %v50 = vpack.c.bf16 %v44, %v38
    %v51 = vpack.c.bf16 %v45, %v39
    %v52 = vpack.c.bf16 %v46, %v40
    %v53 = vpack.c.bf16 %v47, %v41
    %v54 = vpack.c.bf16 %v48, %v42
    %v55 = vld [vmem:[#allocation3] sm:$0xf]
    %v56 = vld [vmem:[#allocation3 + $0x4] sm:$0xf]
    %v57 = vld [vmem:[#allocation3 + $0x8] sm:$0xf]
    %v58 = vld [vmem:[#allocation3 + $0xc] sm:$0xf]
    %v59 = vld [vmem:[#allocation3 + $0x10] sm:$0xf]
    %v60 = vld [vmem:[#allocation3 + $0x14] sm:$0xf]
    %v61 = vld [vmem:[#allocation3 + $0x18] sm:$0xf]
    %v62 = vld [vmem:[#allocation3 + $0x1c] sm:$0xf]
    %v63 = vld [vmem:[#allocation3 + $0x20] sm:$0xf]
    %v64 = vld [vmem:[#allocation3 + $0x24] sm:$0xf]
    %v65 = vld [vmem:[#allocation3 + $0x28] sm:$0xf]
    %v66 = vld [vmem:[#allocation3 + $0x2c] sm:$0xf]
    %v67 = vld [vmem:[#allocation3 + $0x30] sm:$0xf]
    %v68 = vld [vmem:[#allocation3 + $0x34] sm:$0xf]
    %v69 = vld [vmem:[#allocation3 + $0x38] sm:$0xf]
    %v70 = vld [vmem:[#allocation3 + $0x3c] sm:$0xf]
    %v71 = vld [vmem:[#allocation3 + $0x40] sm:$0xf]
    %v72 = vld [vmem:[#allocation3 + $0x44] sm:$0xf]
    %v73 = vld [vmem:[#allocation3 + $0x48] sm:$0xf]
    %v74 = vld [vmem:[#allocation3 + $0x4c] sm:$0xf]
    %v75 = vld [vmem:[#allocation3 + $0x50] sm:$0xf]
    %v76 = vld [vmem:[#allocation3 + $0x54] sm:$0xf]
    %v77 = vld [vmem:[#allocation3 + $0x58] sm:$0xf]
    %v78 = vld [vmem:[#allocation3 + $0x5c] sm:$0xf]
    %v79 = vld [vmem:[#allocation3 + $0x60] sm:$0xf]
    %v80 = vld [vmem:[#allocation3 + $0x64] sm:$0xf]
    %v81 = vld [vmem:[#allocation3 + $0x68] sm:$0xf]
    %v82 = vld [vmem:[#allocation3 + $0x6c] sm:$0xf]
    %v83 = vld [vmem:[#allocation3 + $0x70] sm:$0xf]
    %v84 = vld [vmem:[#allocation3 + $0x74] sm:$0xf]
    %v85 = vld [vmem:[#allocation3 + $0x78] sm:$0xf]
    %v86 = vld [vmem:[#allocation3 + $0x7c] sm:$0xf]
    %v87 = vld [vmem:[#allocation3 + $0x80] sm:$0xf]
    %v88 = vld [vmem:[#allocation3 + $0x84] sm:$0xf]
    %v89 = vld [vmem:[#allocation3 + $0x88] sm:$0xf]
    %v90 = vld [vmem:[#allocation3 + $0x8c] sm:$0xf]
    %v91 = vld [vmem:[#allocation3 + $0x90] sm:$0xf]
    %v92 = vld [vmem:[#allocation3 + $0x94] sm:$0xf]
    %v93 = vld [vmem:[#allocation3 + $0x98] sm:$0xf]
    %v94 = vld [vmem:[#allocation3 + $0x9c] sm:$0xf]
    %v95 = vld [vmem:[#allocation3 + $0xa0] sm:$0xf]
    %v96 = vld [vmem:[#allocation3 + $0xa4] sm:$0xf]
    %v97 = vld [vmem:[#allocation3 + $0xa8] sm:$0xf]
    %v98 = vld [vmem:[#allocation3 + $0xac] sm:$0xf]
    %v99 = vld [vmem:[#allocation3 + $0xb0] sm:$0xf]
    %v100 = vld [vmem:[#allocation3 + $0xb4] sm:$0xf]
    %v101 = vld [vmem:[#allocation3 + $0xb8] sm:$0xf]
    %v102 = vld [vmem:[#allocation3 + $0xbc] sm:$0xf]
    %v103 = vld [vmem:[#allocation3 + $0xc0] sm:$0xf]
    %v104 = vld [vmem:[#allocation3 + $0xc4] sm:$0xf]
    %v105 = vld [vmem:[#allocation3 + $0xc8] sm:$0xf]
    %v106 = vld [vmem:[#allocation3 + $0xcc] sm:$0xf]
    %v107 = vld [vmem:[#allocation3 + $0xd0] sm:$0xf]
    %v108 = vld [vmem:[#allocation3 + $0xd4] sm:$0xf]
    %v109 = vld [vmem:[#allocation3 + $0xd8] sm:$0xf]
    %v110 = vld [vmem:[#allocation3 + $0xdc] sm:$0xf]
    %v111 = vld [vmem:[#allocation3 + $0xe0] sm:$0xf]
    %v112 = vld [vmem:[#allocation3 + $0xe4] sm:$0xf]
    %v113 = vld [vmem:[#allocation3 + $0xe8] sm:$0xf]
    %v114 = vld [vmem:[#allocation3 + $0xec] sm:$0xf]
    %v115 = vld [vmem:[#allocation3 + $0xf0] sm:$0xf]
    %v116 = vld [vmem:[#allocation3 + $0xf4] sm:$0xf]
    %v117 = vld [vmem:[#allocation3 + $0xf8] sm:$0xf]
    %v118 = vld [vmem:[#allocation3 + $0xfc] sm:$0xf]
    %v119 = vld [vmem:[#allocation3 + $0x100] sm:$0xf]
    %v120 = vld [vmem:[#allocation3 + $0x104] sm:$0xf]
    %v121 = vld [vmem:[#allocation3 + $0x108] sm:$0xf]
    %v122 = vld [vmem:[#allocation3 + $0x10c] sm:$0xf]
    %v123 = vld [vmem:[#allocation3 + $0x110] sm:$0xf]
    %v124 = vld [vmem:[#allocation3 + $0x114] sm:$0xf]
    %v125 = vld [vmem:[#allocation3 + $0x118] sm:$0xf]
    %v126 = vld [vmem:[#allocation3 + $0x11c] sm:$0xf]
    %v127 = vld [vmem:[#allocation3 + $0x120] sm:$0xf]
    %v128 = vld [vmem:[#allocation3 + $0x124] sm:$0xf]
    %v129 = vld [vmem:[#allocation3 + $0x128] sm:$0xf]
    %v130 = vld [vmem:[#allocation3 + $0x12c] sm:$0xf]
    %v131 = vld [vmem:[#allocation3 + $0x130] sm:$0xf]
    %v132 = vld [vmem:[#allocation3 + $0x134] sm:$0xf]
    %v133 = vld [vmem:[#allocation3 + $0x138] sm:$0xf]
    %v134 = vld [vmem:[#allocation3 + $0x13c] sm:$0xf]
    %v135 = vld [vmem:[#allocation3 + $0x140] sm:$0xf]
    %v136 = vld [vmem:[#allocation3 + $0x144] sm:$0xf]
    %v137 = vld [vmem:[#allocation3 + $0x148] sm:$0xf]
    %v138 = vld [vmem:[#allocation3 + $0x14c] sm:$0xf]
    %v139 = vld [vmem:[#allocation3 + $0x150] sm:$0xf]
    %v140 = vld [vmem:[#allocation3 + $0x154] sm:$0xf]
    %v141 = vld [vmem:[#allocation3 + $0x158] sm:$0xf]
    %v142 = vld [vmem:[#allocation3 + $0x15c] sm:$0xf]
    %v143 = vld [vmem:[#allocation3 + $0x160] sm:$0xf]
    %v144 = vld [vmem:[#allocation3 + $0x164] sm:$0xf]
    %v145 = vld [vmem:[#allocation3 + $0x168] sm:$0xf]
    %v146 = vld [vmem:[#allocation3 + $0x16c] sm:$0xf]
    %v147 = vld [vmem:[#allocation3 + $0x170] sm:$0xf]
    %v148 = vld [vmem:[#allocation3 + $0x174] sm:$0xf]
    %v149 = vld [vmem:[#allocation3 + $0x178] sm:$0xf]
    %v150 = vld [vmem:[#allocation3 + $0x17c] sm:$0xf]
    %v247 = vunpack.c.l.b16 %v55
    %v248 = vunpack.c.l.b16 %v56
    %v249 = vunpack.c.l.b16 %v57
    %v250 = vunpack.c.l.b16 %v58
    %v251 = vunpack.c.l.b16 %v59
    %v252 = vunpack.c.l.b16 %v60
    %v253 = vunpack.c.l.b16 %v61
    %v254 = vunpack.c.l.b16 %v62
    %v255 = vunpack.c.l.b16 %v63
    %v256 = vunpack.c.l.b16 %v64
    %v257 = vunpack.c.l.b16 %v65
    %v258 = vunpack.c.l.b16 %v66
    %v259 = vunpack.c.l.b16 %v67
    %v260 = vunpack.c.l.b16 %v68
    %v261 = vunpack.c.l.b16 %v69
    %v262 = vunpack.c.l.b16 %v70
    %v263 = vunpack.c.l.b16 %v71
    %v264 = vunpack.c.l.b16 %v72
    %v265 = vunpack.c.l.b16 %v73
    %v266 = vunpack.c.l.b16 %v74
    %v267 = vunpack.c.l.b16 %v75
    %v268 = vunpack.c.l.b16 %v76
    %v269 = vunpack.c.l.b16 %v77
    %v270 = vunpack.c.l.b16 %v78
    %v271 = vunpack.c.l.b16 %v79
    %v272 = vunpack.c.l.b16 %v80
    %v273 = vunpack.c.l.b16 %v81
    %v274 = vunpack.c.l.b16 %v82
    %v275 = vunpack.c.l.b16 %v83
    %v276 = vunpack.c.l.b16 %v84
    %v277 = vunpack.c.l.b16 %v85
    %v278 = vunpack.c.l.b16 %v86
    %v279 = vunpack.c.l.b16 %v87
    %v280 = vunpack.c.l.b16 %v88
    %v281 = vunpack.c.l.b16 %v89
    %v282 = vunpack.c.l.b16 %v90
    %v283 = vunpack.c.l.b16 %v91
    %v284 = vunpack.c.l.b16 %v92
    %v285 = vunpack.c.l.b16 %v93
    %v286 = vunpack.c.l.b16 %v94
    %v287 = vunpack.c.l.b16 %v95
    %v288 = vunpack.c.l.b16 %v96
    %v289 = vunpack.c.l.b16 %v97
    %v290 = vunpack.c.l.b16 %v98
    %v291 = vunpack.c.l.b16 %v99
    %v292 = vunpack.c.l.b16 %v100
    %v293 = vunpack.c.l.b16 %v101
    %v294 = vunpack.c.l.b16 %v102
    %v295 = vunpack.c.l.b16 %v103
    %v296 = vunpack.c.l.b16 %v104
    %v297 = vunpack.c.l.b16 %v105
    %v298 = vunpack.c.l.b16 %v106
    %v299 = vunpack.c.l.b16 %v107
    %v300 = vunpack.c.l.b16 %v108
    %v301 = vunpack.c.l.b16 %v109
    %v302 = vunpack.c.l.b16 %v110
    %v303 = vunpack.c.l.b16 %v111
    %v304 = vunpack.c.l.b16 %v112
    %v305 = vunpack.c.l.b16 %v113
    %v306 = vunpack.c.l.b16 %v114
    %v307 = vunpack.c.l.b16 %v115
    %v308 = vunpack.c.l.b16 %v116
    %v309 = vunpack.c.l.b16 %v117
    %v310 = vunpack.c.l.b16 %v118
    %v311 = vunpack.c.l.b16 %v119
    %v312 = vunpack.c.l.b16 %v120
    %v313 = vunpack.c.l.b16 %v121
    %v314 = vunpack.c.l.b16 %v122
    %v315 = vunpack.c.l.b16 %v123
    %v316 = vunpack.c.l.b16 %v124
    %v317 = vunpack.c.l.b16 %v125
    %v318 = vunpack.c.l.b16 %v126
    %v319 = vunpack.c.l.b16 %v127
    %v320 = vunpack.c.l.b16 %v128
    %v321 = vunpack.c.l.b16 %v129
    %v322 = vunpack.c.l.b16 %v130
    %v323 = vunpack.c.l.b16 %v131
    %v324 = vunpack.c.l.b16 %v132
    %v325 = vunpack.c.l.b16 %v133
    %v326 = vunpack.c.l.b16 %v134
    %v327 = vunpack.c.l.b16 %v135
    %v328 = vunpack.c.l.b16 %v136
    %v329 = vunpack.c.l.b16 %v137
    %v330 = vunpack.c.l.b16 %v138
    %v331 = vunpack.c.l.b16 %v139
    %v332 = vunpack.c.l.b16 %v140
    %v333 = vunpack.c.l.b16 %v141
    %v334 = vunpack.c.l.b16 %v142
    %v335 = vunpack.c.l.b16 %v143
    %v336 = vunpack.c.l.b16 %v144
    %v337 = vunpack.c.l.b16 %v145
    %v338 = vunpack.c.l.b16 %v146
    %v339 = vunpack.c.l.b16 %v147
    %v340 = vunpack.c.l.b16 %v148
    %v341 = vunpack.c.l.b16 %v149
    %v342 = vunpack.c.l.b16 %v150
    %v343 = vpack.c.b16 %v248, %v247
    %v344 = vpack.c.b16 %v250, %v249
    %v345 = vpack.c.b16 %v252, %v251
    %v346 = vpack.c.b16 %v254, %v253
    %v347 = vpack.c.b16 %v256, %v255
    %v348 = vpack.c.b16 %v258, %v257
    %v349 = vpack.c.b16 %v260, %v259
    %v350 = vpack.c.b16 %v262, %v261
    %v351 = vpack.c.b16 %v264, %v263
    %v352 = vpack.c.b16 %v266, %v265
    %v353 = vpack.c.b16 %v268, %v267
    %v354 = vpack.c.b16 %v270, %v269
    %v355 = vpack.c.b16 %v272, %v271
    %v356 = vpack.c.b16 %v274, %v273
    %v357 = vpack.c.b16 %v276, %v275
    %v358 = vpack.c.b16 %v278, %v277
    %v359 = vpack.c.b16 %v280, %v279
    %v360 = vpack.c.b16 %v282, %v281
    %v361 = vpack.c.b16 %v284, %v283
    %v362 = vpack.c.b16 %v286, %v285
    %v363 = vpack.c.b16 %v288, %v287
    %v364 = vpack.c.b16 %v290, %v289
    %v365 = vpack.c.b16 %v292, %v291
    %v366 = vpack.c.b16 %v294, %v293
    %v367 = vpack.c.b16 %v296, %v295
    %v368 = vpack.c.b16 %v298, %v297
    %v369 = vpack.c.b16 %v300, %v299
    %v370 = vpack.c.b16 %v302, %v301
    %v371 = vpack.c.b16 %v304, %v303
    %v372 = vpack.c.b16 %v306, %v305
    %v373 = vpack.c.b16 %v308, %v307
    %v374 = vpack.c.b16 %v310, %v309
    %v375 = vpack.c.b16 %v312, %v311
    %v376 = vpack.c.b16 %v314, %v313
    %v377 = vpack.c.b16 %v316, %v315
    %v378 = vpack.c.b16 %v318, %v317
    %v379 = vpack.c.b16 %v320, %v319
    %v380 = vpack.c.b16 %v322, %v321
    %v381 = vpack.c.b16 %v324, %v323
    %v382 = vpack.c.b16 %v326, %v325
    %v383 = vpack.c.b16 %v328, %v327
    %v384 = vpack.c.b16 %v330, %v329
    %v385 = vpack.c.b16 %v332, %v331
    %v386 = vpack.c.b16 %v334, %v333
    %v387 = vpack.c.b16 %v336, %v335
    %v388 = vpack.c.b16 %v338, %v337
    %v389 = vpack.c.b16 %v340, %v339
    %v390 = vpack.c.b16 %v342, %v341
    %439 = vmatpush.bf16.msra.mxu0 %v350
    %440 = vmatpush.bf16.msra.mxu0 %v349
    %441 = vmatpush.bf16.msra.mxu0 %v348
    %442 = vmatpush.bf16.msra.mxu0 %v347
    %443 = vmatpush.bf16.msra.mxu0 %v346
    %444 = vmatpush.bf16.msra.mxu0 %v345
    %445 = vmatpush.bf16.msra.mxu0 %v344
    %446 = vmatpush.bf16.msra.mxu0 %v343
    %447 = vmatmul.bf16.gmra.mxu0 %v49
    %v448 = vpop.f32.mrf.mxu0
    %v449 = vadd.f32 0.0, %v448
    %v450 = vpop.f32.mrf.mxu0
    %v451 = vadd.f32 0.0, %v450
    %452 = vdwg.mxu0
    %453 = vmatpush.bf16.msra.mxu0 %v358
    %454 = vmatpush.bf16.msra.mxu0 %v357
    %455 = vmatpush.bf16.msra.mxu0 %v356
    %456 = vmatpush.bf16.msra.mxu0 %v355
    %457 = vmatpush.bf16.msra.mxu0 %v354
    %458 = vmatpush.bf16.msra.mxu0 %v353
    %459 = vmatpush.bf16.msra.mxu0 %v352
    %460 = vmatpush.bf16.msra.mxu0 %v351
    %461 = vmatmul.bf16.gmra.mxu0 %v50
    %v462 = vpop.f32.mrf.mxu0
    %v463 = vadd.f32 %v449, %v462
    %v464 = vpop.f32.mrf.mxu0
    %v465 = vadd.f32 %v451, %v464
    %466 = vdwg.mxu0
    %467 = vmatpush.bf16.msra.mxu0 %v366
    %468 = vmatpush.bf16.msra.mxu0 %v365
    %469 = vmatpush.bf16.msra.mxu0 %v364
    %470 = vmatpush.bf16.msra.mxu0 %v363
    %471 = vmatpush.bf16.msra.mxu0 %v362
    %472 = vmatpush.bf16.msra.mxu0 %v361
    %473 = vmatpush.bf16.msra.mxu0 %v360
    %474 = vmatpush.bf16.msra.mxu0 %v359
    %475 = vmatmul.bf16.gmra.mxu0 %v51
    %v476 = vpop.f32.mrf.mxu0
    %v477 = vadd.f32 %v463, %v476
    %v478 = vpop.f32.mrf.mxu0
    %v479 = vadd.f32 %v465, %v478
    %480 = vdwg.mxu0
    %481 = vmatpush.bf16.msra.mxu0 %v374
    %482 = vmatpush.bf16.msra.mxu0 %v373
    %483 = vmatpush.bf16.msra.mxu0 %v372
    %484 = vmatpush.bf16.msra.mxu0 %v371
    %485 = vmatpush.bf16.msra.mxu0 %v370
    %486 = vmatpush.bf16.msra.mxu0 %v369
    %487 = vmatpush.bf16.msra.mxu0 %v368
    %488 = vmatpush.bf16.msra.mxu0 %v367
    %489 = vmatmul.bf16.gmra.mxu0 %v52
    %v490 = vpop.f32.mrf.mxu0
    %v491 = vadd.f32 %v477, %v490
    %v492 = vpop.f32.mrf.mxu0
    %v493 = vadd.f32 %v479, %v492
    %494 = vdwg.mxu0
    %495 = vmatpush.bf16.msra.mxu0 %v382
    %496 = vmatpush.bf16.msra.mxu0 %v381
    %497 = vmatpush.bf16.msra.mxu0 %v380
    %498 = vmatpush.bf16.msra.mxu0 %v379
    %499 = vmatpush.bf16.msra.mxu0 %v378
    %500 = vmatpush.bf16.msra.mxu0 %v377
    %501 = vmatpush.bf16.msra.mxu0 %v376
    %502 = vmatpush.bf16.msra.mxu0 %v375
    %503 = vmatmul.bf16.gmra.mxu0 %v53
    %v504 = vpop.f32.mrf.mxu0
    %v505 = vadd.f32 %v491, %v504
    %v506 = vpop.f32.mrf.mxu0
    %v507 = vadd.f32 %v493, %v506
    %508 = vdwg.mxu0
    %509 = vmatpush.bf16.msra.mxu0 %v390
    %510 = vmatpush.bf16.msra.mxu0 %v389
    %511 = vmatpush.bf16.msra.mxu0 %v388
    %512 = vmatpush.bf16.msra.mxu0 %v387
    %513 = vmatpush.bf16.msra.mxu0 %v386
    %514 = vmatpush.bf16.msra.mxu0 %v385
    %515 = vmatpush.bf16.msra.mxu0 %v384
    %516 = vmatpush.bf16.msra.mxu0 %v383
    %517 = vmatmul.bf16.gmra.mxu0 %v54
    %v518 = vpop.f32.mrf.mxu0
    %v519 = vadd.f32 %v505, %v518
    %v520 = vpop.f32.mrf.mxu0
    %v521 = vadd.f32 %v507, %v520
    %522 = vdwg.mxu0
    %v523 = vadd.f32 %v35, %v519
    %v524 = vadd.f32 %v36, %v521
    %525 = vst [vmem:[#allocation2] sm:$0xff] %v523
    %526 = vst [vmem:[#allocation2 + $0x8] sm:$0xff] %v524
    // Predicated region
    $region18: #{magface_forward.2} parent=1 // pred_check
      %p527 = pneg %p29
    $region19: #{magface_forward.2} parent=1 // pred_check_branch
      %529 = sbr.rel (%p527) target = $region21
    $region20: #{magface_forward.2} parent=1 // pred_region
      %v530 = vld [vmem:[#allocation2] sm:$0xff]
      %v531 = vld [vmem:[#allocation2 + $0x8] sm:$0xff]
      %v532 = vmul.f32 %v530, %v530
      %v533 = vmul.f32 %v531, %v531
      %534 = vadd.xlane.f32.xlu0 %v532
      %v535 = vpop.xlane.xlu0 %534
      %536 = vadd.xlane.f32.xlu0 %v533
      %v537 = vpop.xlane.xlu0 %536
      %v538 = vrsqrt.pop %v535
      %v539 = vmul.f32 %v538, %v535
      %v540 = vmul.f32 %v539, %v538
      %v541 = vmul.f32 0.5, %v540
      %v542 = vsub.f32 1.5, %v541
      %v543 = vmul.f32 %v538, %v542
      %v544 = vmul.f32 %v535, %v543
      %vm545 = vcmp.eq.f32.partialorder %v535, inf
      %v546 = vsel %vm545, %v535, %v544
      %vm547 = vcmp.eq.f32.partialorder %v535, 0.0
      %v548 = vand.u32 %v535, 2147483648
      %v549 = vsel %vm547, %v548, %v546
      %v550 = vrsqrt.pop %v537
      %v551 = vmul.f32 %v550, %v537
      %v552 = vmul.f32 %v551, %v550
      %v553 = vmul.f32 0.5, %v552
      %v554 = vsub.f32 1.5, %v553
      %v555 = vmul.f32 %v550, %v554
      %v556 = vmul.f32 %v537, %v555
      %vm557 = vcmp.eq.f32.partialorder %v537, inf
      %v558 = vsel %vm557, %v537, %v556
      %vm559 = vcmp.eq.f32.partialorder %v537, 0.0
      %v560 = vand.u32 %v537, 2147483648
      %v561 = vsel %vm559, %v560, %v558
      %v562 = vmax.f32 %v549, 10.0
      %v563 = vmax.f32 %v561, 10.0
      %v564 = vmin.f32 %v562, 110.0
      %v565 = vmin.f32 %v563, 110.0
      %v566 = vmax.f32 %v535, 1e-24
      %v567 = vmax.f32 %v537, 1e-24
      %v568 = vrsqrt.pop %v566
      %v569 = vmul.f32 %v568, %v566
      %v570 = vmul.f32 %v569, %v568
      %v571 = vmul.f32 0.5, %v570
      %v572 = vsub.f32 1.5, %v571
      %v573 = vmul.f32 %v568, %v572
      %vm574 = vweird.f32 %v566
      %vm575 = vweird.f32 %v568
      %vm576 = vmor %vm574, %vm575
      %v577 = vsel %vm576, %v568, %v573
      %v578 = vrsqrt.pop %v567
      %v579 = vmul.f32 %v578, %v567
      %v580 = vmul.f32 %v579, %v578
      %v581 = vmul.f32 0.5, %v580
      %v582 = vsub.f32 1.5, %v581
      %v583 = vmul.f32 %v578, %v582
      %vm584 = vweird.f32 %v567
      %vm585 = vweird.f32 %v578
      %vm586 = vmor %vm584, %vm585
      %v587 = vsel %vm586, %v578, %v583
      %v588 = vmul.f32 %v530, %v577
      %v589 = vmul.f32 %v531, %v587
      %v590 = vpack.c.bf16 %v588, %v588
      %v591 = vpack.c.bf16 %v589, %v589
      %592 = vst [vmem:[%s2] sm:$0xf] %v590
      %593 = vst [vmem:[%s2 + $0x4] sm:$0xf] %v591
      %v594 = vsub.f32 %v564, 10.0
      %v595 = vsub.f32 %v565, 10.0
      %v596 = vmul.f32 %v594, 0.0035
      %v597 = vmul.f32 %v595, 0.0035
      %v598 = vadd.f32 %v596, 0.45
      %v599 = vadd.f32 %v597, 0.45
      %v600 = vand.u32 2147483647, %v598
      %vm601 = vcmp.le.f32.partialorder %v600, 0.7853982
      %vm602 = vcmp.lt.s32.totalorder %v598, 0
      %v603 = vand.u32 %v598, 2139095040
      %v604 = vshrl.u32 %v603, 23
      %v605 = vsub.s32 %v604, 127
      %v606 = vand.u32 2147483647, %v598
      %v607 = vand.u32 %v606, 8388607
      %v608 = vor.u32 %v607, 8388608
      %v609 = vsub.s32 0, %v608
      %v610 = vadd.s32 %v605, 1
      %vm611 = vcmp.gt.s32.totalorder %v610, 0
      %v612 = vsel %vm611, %v610, 0
      %v613 = vshrl.u32 %v612, 5
      %v614 = vand.u32 %v612, 31
      %v615 = vsub.s32 32, %v614
      %v616 = vshrl.u32 683565275, %v615
      %v617 = vshll.u32 683565275, %v614
      %v618 = vshrl.u32 2475754826, %v615
      %v619 = vor.u32 %v617, %v618
      %v620 = vshll.u32 2475754826, %v614
      %v621 = vshrl.u32 2131351028, %v615
      %v622 = vor.u32 %v620, %v621
      %v623 = vshll.u32 2131351028, %v614
      %v624 = vshrl.u32 2102212464, %v615
      %v625 = vor.u32 %v623, %v624
      %v626 = vshll.u32 2102212464, %v614
      %v627 = vshrl.u32 920167782, %v615
      %v628 = vor.u32 %v626, %v627
      %v629 = vshll.u32 920167782, %v614
      %v630 = vshrl.u32 1326507024, %v615
      %v631 = vor.u32 %v629, %v630
      %vm632 = vcmp.lt.s32.totalorder %v613, 1
      %vm633 = vcmp.lt.s32.totalorder %v613, 2
      %vm634 = vcmp.lt.s32.totalorder %v613, 3
      %vm635 = vcmp.lt.s32.totalorder %v613, 4
      %v636 = vsel %vm632, %v616, %v619
      %v637 = vsel %vm635, %v625, 2102212464
      %v638 = vsel %vm634, %v622, %v637
      %v639 = vsel %vm633, %v636, %v638
      %v640 = vsel %vm632, %v619, %v622
      %v641 = vsel %vm635, %v628, 920167782
      %v642 = vsel %vm634, %v625, %v641
      %v643 = vsel %vm633, %v640, %v642
      %v644 = vsel %vm632, %v622, %v625
      %v645 = vsel %vm635, %v631, 1326507024
      %v646 = vsel %vm634, %v628, %v645
      %v647 = vsel %vm633, %v644, %v646
      %v648 = vshll.u32 %v608, 8
      %v649 = vand.u32 %v648, 65535
      %v650 = vshrl.u32 %v648, 16
      %v651 = vand.u32 %v647, 65535
      %v652 = vshrl.u32 %v647, 16
      %v653 = vmul.u32 %v649, %v651
      %v654 = vmul.u32 %v649, %v652
      %v655 = vmul.u32 %v650, %v651
      %v656 = vmul.u32 %v650, %v652
      %v657 = vshll.u32 %v654, 16
      %v658 = vshrl.u32 %v654, 16
      %v659 = vshll.u32 %v655, 16
      %v660 = vshrl.u32 %v655, 16
      %vm661 = vc.u32 %v653, %v657
      %v662 = vsel %vm661, 1, 0
      %v663 = vadd.s32 %v653, %v657
      %v664 = vadd.s32 %v656, %v662
      %vm665 = vc.u32 %v663, %v659
      %v666 = vsel %vm665, 1, 0
      %v667 = vadd.s32 %v663, %v659
      %v668 = vadd.s32 %v664, %v666
      %v669 = vadd.s32 %v668, %v658
      %v670 = vadd.s32 %v669, %v660
      %v671 = vand.u32 %v648, 65535
      %v672 = vshrl.u32 %v648, 16
      %v673 = vand.u32 %v643, 65535
      %v674 = vshrl.u32 %v643, 16
      %v675 = vmul.u32 %v671, %v673
      %v676 = vmul.u32 %v671, %v674
      %v677 = vmul.u32 %v672, %v673
      %v678 = vmul.u32 %v672, %v674
      %v679 = vshll.u32 %v676, 16
      %v680 = vshrl.u32 %v676, 16
      %v681 = vshll.u32 %v677, 16
      %v682 = vshrl.u32 %v677, 16
      %vm683 = vc.u32 %v675, %v679
      %v684 = vsel %vm683, 1, 0
      %v685 = vadd.s32 %v675, %v679
      %v686 = vadd.s32 %v678, %v684
      %vm687 = vc.u32 %v685, %v681
      %v688 = vsel %vm687, 1, 0
      %v689 = vadd.s32 %v685, %v681
      %v690 = vadd.s32 %v686, %v688
      %v691 = vadd.s32 %v690, %v680
      %v692 = vadd.s32 %v691, %v682
      %v693 = vmul.u32 %v648, %v639
      %v694 = vadd.s32 %v670, %v689
      %vm695 = vc.u32 %v670, %v689
      %v696 = vadd.s32 %v692, 1
      %v697 = vsel %vm695, %v696, %v692
      %v698 = vadd.s32 %v693, %v697
      %v699 = vadd.s32 %v698, 536870912
      %v700 = vshrl.u32 %v699, 30
      %v701 = vshll.u32 %v700, 30
      %v702 = vsub.s32 %v698, %v701
      %vm703 = vcmp.lt.s32.totalorder %v702, 0
      %v704 = vsub.s32 0, %v702
      %v705 = vsel %vm703, %v704, %v702
      %v706 = vclz %v705
      %v707 = vsub.s32 %v706, 2
      %vm708 = vcmp.gt.s32.totalorder 0, %v707
      %v709 = vsel %vm708, 0, %v707
      %v710 = vsub.s32 32, %v709
      %v711 = vshll.u32 %v702, %v709
      %v712 = vshrl.u32 %v694, %v710
      %v713 = vor.u32 %v711, %v712
      %v714 = vsub.s32 4294967266, %v709
      %v715 = vadd.s32 %v714, 127
      %v716 = vshll.u32 %v715, 23
      %v717 = vor.u32 4788187, %v716
      %v718 = vand.u32 2147483647, %v717
      %v720 = vcvt.s32.f32 %v713
      %v721 = vmul.f32 %v720, %v718
      %v722 = vxor.u32 %v721, 2147483648
      %v723 = vsel %vm602, %v722, %v721
      %v724 = vsub.s32 4, %v700
      %v725 = vsel %vm602, %v724, %v700
      %v726 = vsel %vm601, %v598, %v723
      %v727 = vsel %vm601, 0, %v725
      %v728 = vmul.f32 %v726, %v726
      %v729 = vmul.f32 %v728, -0.001358992
      %v730 = vadd.f32 %v729, 0.041655596
      %v731 = vmul.f32 %v728, %v730
      %v732 = vadd.f32 %v731, -0.4999988
      %v733 = vmul.f32 %v728, %v732
      %v734 = vadd.f32 1.0, %v733
      %v735 = vmul.f32 %v726, %v726
      %v736 = vmul.f32 %v735, -0.00019511016
      %v737 = vadd.f32 %v736, 0.008332121
      %v738 = vmul.f32 %v735, %v737
      %v739 = vadd.f32 %v738, -0.16666654
      %v740 = vmul.f32 %v735, %v739
      %v741 = vadd.f32 %v740, 1.0
      %v742 = vmul.f32 %v741, %v726
      %vm743 = vweird.f32 %v598
      %v744 = vand.u32 %v727, 3
      %vm745 = vcmp.lt.s32.totalorder %v744, 2
      %vm746 = vcmp.eq.s32.totalorder %v744, 0
      %v747 = vxor.u32 %v742, 2147483648
      %v748 = vsel %vm746, %v734, %v747
      %vm749 = vcmp.eq.s32.totalorder %v744, 2
      %v750 = vxor.u32 %v734, 2147483648
      %v751 = vsel %vm749, %v750, %v742
      %v752 = vsel %vm745, %v748, %v751
      %v753 = vsel %vm743, nan, %v752
      %v754 = vand.u32 2147483647, %v599
      %vm755 = vcmp.le.f32.partialorder %v754, 0.7853982
      %vm756 = vcmp.lt.s32.totalorder %v599, 0
      %v757 = vand.u32 %v599, 2139095040
      %v758 = vshrl.u32 %v757, 23
      %v759 = vsub.s32 %v758, 127
      %v760 = vand.u32 2147483647, %v599
      %v761 = vand.u32 %v760, 8388607
      %v762 = vor.u32 %v761, 8388608
      %v763 = vsub.s32 0, %v762
      %v764 = vadd.s32 %v759, 1
      %vm765 = vcmp.gt.s32.totalorder %v764, 0
      %v766 = vsel %vm765, %v764, 0
      %v767 = vshrl.u32 %v766, 5
      %v768 = vand.u32 %v766, 31
      %v769 = vsub.s32 32, %v768
      %v770 = vshrl.u32 683565275, %v769
      %v771 = vshll.u32 683565275, %v768
      %v772 = vshrl.u32 2475754826, %v769
      %v773 = vor.u32 %v771, %v772
      %v774 = vshll.u32 2475754826, %v768
      %v775 = vshrl.u32 2131351028, %v769
      %v776 = vor.u32 %v774, %v775
      %v777 = vshll.u32 2131351028, %v768
      %v778 = vshrl.u32 2102212464, %v769
      %v779 = vor.u32 %v777, %v778
      %v780 = vshll.u32 2102212464, %v768
      %v781 = vshrl.u32 920167782, %v769
      %v782 = vor.u32 %v780, %v781
      %v783 = vshll.u32 920167782, %v768
      %v784 = vshrl.u32 1326507024, %v769
      %v785 = vor.u32 %v783, %v784
      %vm786 = vcmp.lt.s32.totalorder %v767, 1
      %vm787 = vcmp.lt.s32.totalorder %v767, 2
      %vm788 = vcmp.lt.s32.totalorder %v767, 3
      %vm789 = vcmp.lt.s32.totalorder %v767, 4
      %v790 = vsel %vm786, %v770, %v773
      %v791 = vsel %vm789, %v779, 2102212464
      %v792 = vsel %vm788, %v776, %v791
      %v793 = vsel %vm787, %v790, %v792
      %v794 = vsel %vm786, %v773, %v776
      %v795 = vsel %vm789, %v782, 920167782
      %v796 = vsel %vm788, %v779, %v795
      %v797 = vsel %vm787, %v794, %v796
      %v798 = vsel %vm786, %v776, %v779
      %v799 = vsel %vm789, %v785, 1326507024
      %v800 = vsel %vm788, %v782, %v799
      %v801 = vsel %vm787, %v798, %v800
      %v802 = vshll.u32 %v762, 8
      %v803 = vand.u32 %v802, 65535
      %v804 = vshrl.u32 %v802, 16
      %v805 = vand.u32 %v801, 65535
      %v806 = vshrl.u32 %v801, 16
      %v807 = vmul.u32 %v803, %v805
      %v808 = vmul.u32 %v803, %v806
      %v809 = vmul.u32 %v804, %v805
      %v810 = vmul.u32 %v804, %v806
      %v811 = vshll.u32 %v808, 16
      %v812 = vshrl.u32 %v808, 16
      %v813 = vshll.u32 %v809, 16
      %v814 = vshrl.u32 %v809, 16
      %vm815 = vc.u32 %v807, %v811
      %v816 = vsel %vm815, 1, 0
      %v817 = vadd.s32 %v807, %v811
      %v818 = vadd.s32 %v810, %v816
      %vm819 = vc.u32 %v817, %v813
      %v820 = vsel %vm819, 1, 0
      %v821 = vadd.s32 %v817, %v813
      %v822 = vadd.s32 %v818, %v820
      %v823 = vadd.s32 %v822, %v812
      %v824 = vadd.s32 %v823, %v814
      %v825 = vand.u32 %v802, 65535
      %v826 = vshrl.u32 %v802, 16
      %v827 = vand.u32 %v797, 65535
      %v828 = vshrl.u32 %v797, 16
      %v829 = vmul.u32 %v825, %v827
      %v830 = vmul.u32 %v825, %v828
      %v831 = vmul.u32 %v826, %v827
      %v832 = vmul.u32 %v826, %v828
      %v833 = vshll.u32 %v830, 16
      %v834 = vshrl.u32 %v830, 16
      %v835 = vshll.u32 %v831, 16
      %v836 = vshrl.u32 %v831, 16
      %vm837 = vc.u32 %v829, %v833
      %v838 = vsel %vm837, 1, 0
      %v839 = vadd.s32 %v829, %v833
      %v840 = vadd.s32 %v832, %v838
      %vm841 = vc.u32 %v839, %v835
      %v842 = vsel %vm841, 1, 0
      %v843 = vadd.s32 %v839, %v835
      %v844 = vadd.s32 %v840, %v842
      %v845 = vadd.s32 %v844, %v834
      %v846 = vadd.s32 %v845, %v836
      %v847 = vmul.u32 %v802, %v793
      %v848 = vadd.s32 %v824, %v843
      %vm849 = vc.u32 %v824, %v843
      %v850 = vadd.s32 %v846, 1
      %v851 = vsel %vm849, %v850, %v846
      %v852 = vadd.s32 %v847, %v851
      %v853 = vadd.s32 %v852, 536870912
      %v854 = vshrl.u32 %v853, 30
      %v855 = vshll.u32 %v854, 30
      %v856 = vsub.s32 %v852, %v855
      %vm857 = vcmp.lt.s32.totalorder %v856, 0
      %v858 = vsub.s32 0, %v856
      %v859 = vsel %vm857, %v858, %v856
      %v860 = vclz %v859
      %v861 = vsub.s32 %v860, 2
      %vm862 = vcmp.gt.s32.totalorder 0, %v861
      %v863 = vsel %vm862, 0, %v861
      %v864 = vsub.s32 32, %v863
      %v865 = vshll.u32 %v856, %v863
      %v866 = vshrl.u32 %v848, %v864
      %v867 = vor.u32 %v865, %v866
      %v868 = vsub.s32 4294967266, %v863
      %v869 = vadd.s32 %v868, 127
      %v870 = vshll.u32 %v869, 23
      %v871 = vor.u32 4788187, %v870
      %v872 = vand.u32 2147483647, %v871
      %v874 = vcvt.s32.f32 %v867
      %v875 = vmul.f32 %v874, %v872
      %v876 = vxor.u32 %v875, 2147483648
      %v877 = vsel %vm756, %v876, %v875
      %v878 = vsub.s32 4, %v854
      %v879 = vsel %vm756, %v878, %v854
      %v880 = vsel %vm755, %v599, %v877
      %v881 = vsel %vm755, 0, %v879
      %v882 = vmul.f32 %v880, %v880
      %v883 = vmul.f32 %v882, -0.001358992
      %v884 = vadd.f32 %v883, 0.041655596
      %v885 = vmul.f32 %v882, %v884
      %v886 = vadd.f32 %v885, -0.4999988
      %v887 = vmul.f32 %v882, %v886
      %v888 = vadd.f32 1.0, %v887
      %v889 = vmul.f32 %v880, %v880
      %v890 = vmul.f32 %v889, -0.00019511016
      %v891 = vadd.f32 %v890, 0.008332121
      %v892 = vmul.f32 %v889, %v891
      %v893 = vadd.f32 %v892, -0.16666654
      %v894 = vmul.f32 %v889, %v893
      %v895 = vadd.f32 %v894, 1.0
      %v896 = vmul.f32 %v895, %v880
      %vm897 = vweird.f32 %v599
      %v898 = vand.u32 %v881, 3
      %vm899 = vcmp.lt.s32.totalorder %v898, 2
      %vm900 = vcmp.eq.s32.totalorder %v898, 0
      %v901 = vxor.u32 %v896, 2147483648
      %v902 = vsel %vm900, %v888, %v901
      %vm903 = vcmp.eq.s32.totalorder %v898, 2
      %v904 = vxor.u32 %v888, 2147483648
      %v905 = vsel %vm903, %v904, %v896
      %v906 = vsel %vm899, %v902, %v905
      %v907 = vsel %vm897, nan, %v906
      %v908 = vand.u32 2147483647, %v598
      %vm909 = vcmp.le.f32.partialorder %v908, 0.7853982
      %vm910 = vcmp.lt.s32.totalorder %v598, 0
      %v911 = vand.u32 %v598, 2139095040
      %v912 = vshrl.u32 %v911, 23
      %v913 = vsub.s32 %v912, 127
      %v914 = vand.u32 2147483647, %v598
      %v915 = vand.u32 %v914, 8388607
      %v916 = vor.u32 %v915, 8388608
      %v917 = vsub.s32 0, %v916
      %v918 = vadd.s32 %v913, 1
      %vm919 = vcmp.gt.s32.totalorder %v918, 0
      %v920 = vsel %vm919, %v918, 0
      %v921 = vshrl.u32 %v920, 5
      %v922 = vand.u32 %v920, 31
      %v923 = vsub.s32 32, %v922
      %v924 = vshrl.u32 683565275, %v923
      %v925 = vshll.u32 683565275, %v922
      %v926 = vshrl.u32 2475754826, %v923
      %v927 = vor.u32 %v925, %v926
      %v928 = vshll.u32 2475754826, %v922
      %v929 = vshrl.u32 2131351028, %v923
      %v930 = vor.u32 %v928, %v929
      %v931 = vshll.u32 2131351028, %v922
      %v932 = vshrl.u32 2102212464, %v923
      %v933 = vor.u32 %v931, %v932
      %v934 = vshll.u32 2102212464, %v922
      %v935 = vshrl.u32 920167782, %v923
      %v936 = vor.u32 %v934, %v935
      %v937 = vshll.u32 920167782, %v922
      %v938 = vshrl.u32 1326507024, %v923
      %v939 = vor.u32 %v937, %v938
      %vm940 = vcmp.lt.s32.totalorder %v921, 1
      %vm941 = vcmp.lt.s32.totalorder %v921, 2
      %vm942 = vcmp.lt.s32.totalorder %v921, 3
      %vm943 = vcmp.lt.s32.totalorder %v921, 4
      %v944 = vsel %vm940, %v924, %v927
      %v945 = vsel %vm943, %v933, 2102212464
      %v946 = vsel %vm942, %v930, %v945
      %v947 = vsel %vm941, %v944, %v946
      %v948 = vsel %vm940, %v927, %v930
      %v949 = vsel %vm943, %v936, 920167782
      %v950 = vsel %vm942, %v933, %v949
      %v951 = vsel %vm941, %v948, %v950
      %v952 = vsel %vm940, %v930, %v933
      %v953 = vsel %vm943, %v939, 1326507024
      %v954 = vsel %vm942, %v936, %v953
      %v955 = vsel %vm941, %v952, %v954
      %v956 = vshll.u32 %v916, 8
      %v957 = vand.u32 %v956, 65535
      %v958 = vshrl.u32 %v956, 16
      %v959 = vand.u32 %v955, 65535
      %v960 = vshrl.u32 %v955, 16
      %v961 = vmul.u32 %v957, %v959
      %v962 = vmul.u32 %v957, %v960
      %v963 = vmul.u32 %v958, %v959
      %v964 = vmul.u32 %v958, %v960
      %v965 = vshll.u32 %v962, 16
      %v966 = vshrl.u32 %v962, 16
      %v967 = vshll.u32 %v963, 16
      %v968 = vshrl.u32 %v963, 16
      %vm969 = vc.u32 %v961, %v965
      %v970 = vsel %vm969, 1, 0
      %v971 = vadd.s32 %v961, %v965
      %v972 = vadd.s32 %v964, %v970
      %vm973 = vc.u32 %v971, %v967
      %v974 = vsel %vm973, 1, 0
      %v975 = vadd.s32 %v971, %v967
      %v976 = vadd.s32 %v972, %v974
      %v977 = vadd.s32 %v976, %v966
      %v978 = vadd.s32 %v977, %v968
      %v979 = vand.u32 %v956, 65535
      %v980 = vshrl.u32 %v956, 16
      %v981 = vand.u32 %v951, 65535
      %v982 = vshrl.u32 %v951, 16
      %v983 = vmul.u32 %v979, %v981
      %v984 = vmul.u32 %v979, %v982
      %v985 = vmul.u32 %v980, %v981
      %v986 = vmul.u32 %v980, %v982
      %v987 = vshll.u32 %v984, 16
      %v988 = vshrl.u32 %v984, 16
      %v989 = vshll.u32 %v985, 16
      %v990 = vshrl.u32 %v985, 16
      %vm991 = vc.u32 %v983, %v987
      %v992 = vsel %vm991, 1, 0
      %v993 = vadd.s32 %v983, %v987
      %v994 = vadd.s32 %v986, %v992
      %vm995 = vc.u32 %v993, %v989
      %v996 = vsel %vm995, 1, 0
      %v997 = vadd.s32 %v993, %v989
      %v998 = vadd.s32 %v994, %v996
      %v999 = vadd.s32 %v998, %v988
      %v1000 = vadd.s32 %v999, %v990
      %v1001 = vmul.u32 %v956, %v947
      %v1002 = vadd.s32 %v978, %v997
      %vm1003 = vc.u32 %v978, %v997
      %v1004 = vadd.s32 %v1000, 1
      %v1005 = vsel %vm1003, %v1004, %v1000
      %v1006 = vadd.s32 %v1001, %v1005
      %v1007 = vadd.s32 %v1006, 536870912
      %v1008 = vshrl.u32 %v1007, 30
      %v1009 = vshll.u32 %v1008, 30
      %v1010 = vsub.s32 %v1006, %v1009
      %vm1011 = vcmp.lt.s32.totalorder %v1010, 0
      %v1012 = vsub.s32 0, %v1010
      %v1013 = vsel %vm1011, %v1012, %v1010
      %v1014 = vclz %v1013
      %v1015 = vsub.s32 %v1014, 2
      %vm1016 = vcmp.gt.s32.totalorder 0, %v1015
      %v1017 = vsel %vm1016, 0, %v1015
      %v1018 = vsub.s32 32, %v1017
      %v1019 = vshll.u32 %v1010, %v1017
      %v1020 = vshrl.u32 %v1002, %v1018
      %v1021 = vor.u32 %v1019, %v1020
      %v1022 = vsub.s32 4294967266, %v1017
      %v1023 = vadd.s32 %v1022, 127
      %v1024 = vshll.u32 %v1023, 23
      %v1025 = vor.u32 4788187, %v1024
      %v1026 = vand.u32 2147483647, %v1025
      %v1028 = vcvt.s32.f32 %v1021
      %v1029 = vmul.f32 %v1028, %v1026
      %v1030 = vxor.u32 %v1029, 2147483648
      %v1031 = vsel %vm910, %v1030, %v1029
      %v1032 = vsub.s32 4, %v1008
      %v1033 = vsel %vm910, %v1032, %v1008
      %v1034 = vsel %vm909, %v598, %v1031
      %v1035 = vsel %vm909, 0, %v1033
      %v1036 = vmul.f32 %v1034, %v1034
      %v1037 = vmul.f32 %v1036, -0.001358992
      %v1038 = vadd.f32 %v1037, 0.041655596
      %v1039 = vmul.f32 %v1036, %v1038
      %v1040 = vadd.f32 %v1039, -0.4999988
      %v1041 = vmul.f32 %v1036, %v1040
      %v1042 = vadd.f32 1.0, %v1041
      %v1043 = vmul.f32 %v1034, %v1034
      %v1044 = vmul.f32 %v1043, -0.00019511016
      %v1045 = vadd.f32 %v1044, 0.008332121
      %v1046 = vmul.f32 %v1043, %v1045
      %v1047 = vadd.f32 %v1046, -0.16666654
      %v1048 = vmul.f32 %v1043, %v1047
      %v1049 = vadd.f32 %v1048, 1.0
      %v1050 = vmul.f32 %v1049, %v1034
      %vm1051 = vweird.f32 %v598
      %v1052 = vadd.s32 %v1035, 3
      %v1053 = vand.u32 %v1052, 3
      %vm1054 = vcmp.lt.s32.totalorder %v1053, 2
      %vm1055 = vcmp.eq.s32.totalorder %v1053, 0
      %v1056 = vxor.u32 %v1050, 2147483648
      %v1057 = vsel %vm1055, %v1042, %v1056
      %vm1058 = vcmp.eq.s32.totalorder %v1053, 2
      %v1059 = vxor.u32 %v1042, 2147483648
      %v1060 = vsel %vm1058, %v1059, %v1050
      %v1061 = vsel %vm1054, %v1057, %v1060
      %v1062 = vsel %vm1051, nan, %v1061
      %v1063 = vand.u32 2147483647, %v599
      %vm1064 = vcmp.le.f32.partialorder %v1063, 0.7853982
      %vm1065 = vcmp.lt.s32.totalorder %v599, 0
      %v1066 = vand.u32 %v599, 2139095040
      %v1067 = vshrl.u32 %v1066, 23
      %v1068 = vsub.s32 %v1067, 127
      %v1069 = vand.u32 2147483647, %v599
      %v1070 = vand.u32 %v1069, 8388607
      %v1071 = vor.u32 %v1070, 8388608
      %v1072 = vsub.s32 0, %v1071
      %v1073 = vadd.s32 %v1068, 1
      %vm1074 = vcmp.gt.s32.totalorder %v1073, 0
      %v1075 = vsel %vm1074, %v1073, 0
      %v1076 = vshrl.u32 %v1075, 5
      %v1077 = vand.u32 %v1075, 31
      %v1078 = vsub.s32 32, %v1077
      %v1079 = vshrl.u32 683565275, %v1078
      %v1080 = vshll.u32 683565275, %v1077
      %v1081 = vshrl.u32 2475754826, %v1078
      %v1082 = vor.u32 %v1080, %v1081
      %v1083 = vshll.u32 2475754826, %v1077
      %v1084 = vshrl.u32 2131351028, %v1078
      %v1085 = vor.u32 %v1083, %v1084
      %v1086 = vshll.u32 2131351028, %v1077
      %v1087 = vshrl.u32 2102212464, %v1078
      %v1088 = vor.u32 %v1086, %v1087
      %v1089 = vshll.u32 2102212464, %v1077
      %v1090 = vshrl.u32 920167782, %v1078
      %v1091 = vor.u32 %v1089, %v1090
      %v1092 = vshll.u32 920167782, %v1077
      %v1093 = vshrl.u32 1326507024, %v1078
      %v1094 = vor.u32 %v1092, %v1093
      %vm1095 = vcmp.lt.s32.totalorder %v1076, 1
      %vm1096 = vcmp.lt.s32.totalorder %v1076, 2
      %vm1097 = vcmp.lt.s32.totalorder %v1076, 3
      %vm1098 = vcmp.lt.s32.totalorder %v1076, 4
      %v1099 = vsel %vm1095, %v1079, %v1082
      %v1100 = vsel %vm1098, %v1088, 2102212464
      %v1101 = vsel %vm1097, %v1085, %v1100
      %v1102 = vsel %vm1096, %v1099, %v1101
      %v1103 = vsel %vm1095, %v1082, %v1085
      %v1104 = vsel %vm1098, %v1091, 920167782
      %v1105 = vsel %vm1097, %v1088, %v1104
      %v1106 = vsel %vm1096, %v1103, %v1105
      %v1107 = vsel %vm1095, %v1085, %v1088
      %v1108 = vsel %vm1098, %v1094, 1326507024
      %v1109 = vsel %vm1097, %v1091, %v1108
      %v1110 = vsel %vm1096, %v1107, %v1109
      %v1111 = vshll.u32 %v1071, 8
      %v1112 = vand.u32 %v1111, 65535
      %v1113 = vshrl.u32 %v1111, 16
      %v1114 = vand.u32 %v1110, 65535
      %v1115 = vshrl.u32 %v1110, 16
      %v1116 = vmul.u32 %v1112, %v1114
      %v1117 = vmul.u32 %v1112, %v1115
      %v1118 = vmul.u32 %v1113, %v1114
      %v1119 = vmul.u32 %v1113, %v1115
      %v1120 = vshll.u32 %v1117, 16
      %v1121 = vshrl.u32 %v1117, 16
      %v1122 = vshll.u32 %v1118, 16
      %v1123 = vshrl.u32 %v1118, 16
      %vm1124 = vc.u32 %v1116, %v1120
      %v1125 = vsel %vm1124, 1, 0
      %v1126 = vadd.s32 %v1116, %v1120
      %v1127 = vadd.s32 %v1119, %v1125
      %vm1128 = vc.u32 %v1126, %v1122
      %v1129 = vsel %vm1128, 1, 0
      %v1130 = vadd.s32 %v1126, %v1122
      %v1131 = vadd.s32 %v1127, %v1129
      %v1132 = vadd.s32 %v1131, %v1121
      %v1133 = vadd.s32 %v1132, %v1123
      %v1134 = vand.u32 %v1111, 65535
      %v1135 = vshrl.u32 %v1111, 16
      %v1136 = vand.u32 %v1106, 65535
      %v1137 = vshrl.u32 %v1106, 16
      %v1138 = vmul.u32 %v1134, %v1136
      %v1139 = vmul.u32 %v1134, %v1137
      %v1140 = vmul.u32 %v1135, %v1136
      %v1141 = vmul.u32 %v1135, %v1137
      %v1142 = vshll.u32 %v1139, 16
      %v1143 = vshrl.u32 %v1139, 16
      %v1144 = vshll.u32 %v1140, 16
      %v1145 = vshrl.u32 %v1140, 16
      %vm1146 = vc.u32 %v1138, %v1142
      %v1147 = vsel %vm1146, 1, 0
      %v1148 = vadd.s32 %v1138, %v1142
      %v1149 = vadd.s32 %v1141, %v1147
      %vm1150 = vc.u32 %v1148, %v1144
      %v1151 = vsel %vm1150, 1, 0
      %v1152 = vadd.s32 %v1148, %v1144
      %v1153 = vadd.s32 %v1149, %v1151
      %v1154 = vadd.s32 %v1153, %v1143
      %v1155 = vadd.s32 %v1154, %v1145
      %v1156 = vmul.u32 %v1111, %v1102
      %v1157 = vadd.s32 %v1133, %v1152
      %vm1158 = vc.u32 %v1133, %v1152
      %v1159 = vadd.s32 %v1155, 1
      %v1160 = vsel %vm1158, %v1159, %v1155
      %v1161 = vadd.s32 %v1156, %v1160
      %v1162 = vadd.s32 %v1161, 536870912
      %v1163 = vshrl.u32 %v1162, 30
      %v1164 = vshll.u32 %v1163, 30
      %v1165 = vsub.s32 %v1161, %v1164
      %vm1166 = vcmp.lt.s32.totalorder %v1165, 0
      %v1167 = vsub.s32 0, %v1165
      %v1168 = vsel %vm1166, %v1167, %v1165
      %v1169 = vclz %v1168
      %v1170 = vsub.s32 %v1169, 2
      %vm1171 = vcmp.gt.s32.totalorder 0, %v1170
      %v1172 = vsel %vm1171, 0, %v1170
      %v1173 = vsub.s32 32, %v1172
      %v1174 = vshll.u32 %v1165, %v1172
      %v1175 = vshrl.u32 %v1157, %v1173
      %v1176 = vor.u32 %v1174, %v1175
      %v1177 = vsub.s32 4294967266, %v1172
      %v1178 = vadd.s32 %v1177, 127
      %v1179 = vshll.u32 %v1178, 23
      %v1180 = vor.u32 4788187, %v1179
      %v1181 = vand.u32 2147483647, %v1180
      %v1183 = vcvt.s32.f32 %v1176
      %v1184 = vmul.f32 %v1183, %v1181
      %v1185 = vxor.u32 %v1184, 2147483648
      %v1186 = vsel %vm1065, %v1185, %v1184
      %v1187 = vsub.s32 4, %v1163
      %v1188 = vsel %vm1065, %v1187, %v1163
      %v1189 = vsel %vm1064, %v599, %v1186
      %v1190 = vsel %vm1064, 0, %v1188
      %v1191 = vmul.f32 %v1189, %v1189
      %v1192 = vmul.f32 %v1191, -0.001358992
      %v1193 = vadd.f32 %v1192, 0.041655596
      %v1194 = vmul.f32 %v1191, %v1193
      %v1195 = vadd.f32 %v1194, -0.4999988
      %v1196 = vmul.f32 %v1191, %v1195
      %v1197 = vadd.f32 1.0, %v1196
      %v1198 = vmul.f32 %v1189, %v1189
      %v1199 = vmul.f32 %v1198, -0.00019511016
      %v1200 = vadd.f32 %v1199, 0.008332121
      %v1201 = vmul.f32 %v1198, %v1200
      %v1202 = vadd.f32 %v1201, -0.16666654
      %v1203 = vmul.f32 %v1198, %v1202
      %v1204 = vadd.f32 %v1203, 1.0
      %v1205 = vmul.f32 %v1204, %v1189
      %vm1206 = vweird.f32 %v599
      %v1207 = vadd.s32 %v1190, 3
      %v1208 = vand.u32 %v1207, 3
      %vm1209 = vcmp.lt.s32.totalorder %v1208, 2
      %vm1210 = vcmp.eq.s32.totalorder %v1208, 0
      %v1211 = vxor.u32 %v1205, 2147483648
      %v1212 = vsel %vm1210, %v1197, %v1211
      %vm1213 = vcmp.eq.s32.totalorder %v1208, 2
      %v1214 = vxor.u32 %v1197, 2147483648
      %v1215 = vsel %vm1213, %v1214, %v1205
      %v1216 = vsel %vm1209, %v1212, %v1215
      %v1217 = vsel %vm1206, nan, %v1216
      %v1218 = vlaneseq
      %v1219 = vand.u32 %v1218, 127
      %vm1220 = vcmp.eq.s32.totalorder %v1219, 0
      %v1221 = vsel %vm1220, %v564, 0.0
      %v1222 = vsel %vm1220, %v565, 0.0
      %vm1223 = vcmp.eq.s32.totalorder %v1219, 1
      %v1224 = vsel %vm1223, %v753, %v1221
      %v1225 = vsel %vm1223, %v907, %v1222
      %vm1226 = vcmp.eq.s32.totalorder %v1219, 2
      %v1227 = vsel %vm1226, %v1062, %v1224
      %v1228 = vsel %vm1226, %v1217, %v1225
      %1229 = vst [vmem:[%s3] sm:$0xff] %v1227
      %1230 = vst [vmem:[%s3 + $0x8] sm:$0xff] %v1228
    $region21: #{magface_forward.2} parent=1 // pred_fallthru
      _
    // Predicated region
    $region22: #{magface_forward.2} parent=1 // pred_check
      _
    $region23: #{magface_forward.2} parent=1 // pred_check_branch
      %1232 = sbr.rel (0) target = $region25
    $region24: #{magface_forward.2} parent=1 // pred_region
      _
    $region25: #{magface_forward.2} parent=1 // pred_fallthru
      _
    // Predicated region
    $region26: #{magface_forward.2} parent=1 // pred_check
      _
    $region27: #{magface_forward.2} parent=1 // pred_check_branch
      %1234 = sbr.rel (0) target = $region29
    $region28: #{magface_forward.2} parent=1 // pred_region
      _
    $region29: #{magface_forward.2} parent=1 // pred_fallthru
      _
    // Predicated region
    $region30: #{magface_forward.2} parent=1 // pred_check
      _
    $region31: #{magface_forward.2} parent=1 // pred_check_branch
      %1236 = sbr.rel (0) target = $region33
    $region32: #{magface_forward.2} parent=1 // pred_region
      _
    $region33: #{magface_forward.2} parent=1 // pred_fallthru
      _
    // Predicated region
    $region34: #{magface_forward.2} parent=1 // pred_check
      _
    $region35: #{magface_forward.2} parent=1 // pred_check_branch
      %1238 = sbr.rel (0) target = $region37
    $region36: #{magface_forward.2} parent=1 // pred_region
      _
    $region37: #{magface_forward.2} parent=1 // pred_fallthru
      _
    %1239 = vsyncpa [#allocation4], 1

// kernel: magface_forward.3
$region0: #{magface_forward.3}
  #allocation0 [shape = 'u32[]', space=smem, size = 0x4, offset = 0x4, fixed_abs, tag = 'smem constant byte address 0x4 - core index']
  #allocation1 [shape = 'u32[72,128]{1,0:T(1,128)}', space=vmem, size = 0x9000, scoped, tag = 'internal scratch']
  %s0 = inlined_call_operand.vmem [shape: bf16[16,128], index: 0, kind: input, shape index: {}]
  %s1 = inlined_call_operand.vmem [shape: f32[16,128], index: 1, kind: input, shape index: {}]
  %s2 = inlined_call_operand.vmem [shape: bf16[128,1024], index: 2, kind: input, shape index: {}]
  %s3 = inlined_call_operand.vmem [shape: f32[16,1024], index: 3, kind: output, shape index: {0}]
  %s4 = inlined_call_operand.vmem [shape: f32[16,1024], index: 4, kind: output, shape index: {1}]
  %5 = xla_tuple %s3, %s4
  %s6 = sld [smem:[#allocation0]]
  $region30: #{magface_forward.3} parent=0
    _
  %s8 = ssub.s32 1, %s6
  %s9 = scalar_select 0, %s8, %s6
  // Predicated region
  $region2: #{magface_forward.3} parent=0 // pred_check
    _
  $region3: #{magface_forward.3} parent=0 // pred_check_branch
    %11 = sbr.rel (0) target = $region5
  $region4: #{magface_forward.3} parent=0 // pred_region
    _
  $region5: #{magface_forward.3} parent=0 // pred_fallthru
    _
  // Predicated region
  $region6: #{magface_forward.3} parent=0 // pred_check
    _
  $region7: #{magface_forward.3} parent=0 // pred_check_branch
    %13 = sbr.rel (0) target = $region9
  $region8: #{magface_forward.3} parent=0 // pred_region
    _
  $region9: #{magface_forward.3} parent=0 // pred_fallthru
    _
  // Predicated region
  $region10: #{magface_forward.3} parent=0 // pred_check
    _
  $region11: #{magface_forward.3} parent=0 // pred_check_branch
    %15 = sbr.rel (0) target = $region13
  $region12: #{magface_forward.3} parent=0 // pred_region
    _
  $region13: #{magface_forward.3} parent=0 // pred_fallthru
    _
  %v16 = vld [vmem:[%s0] sm:$0xf]
  %v17 = vld [vmem:[%s0 + $0x4] sm:$0xf]
  %v18 = vld [vmem:[%s2] sm:$0xff]
  %v19 = vld [vmem:[%s2 + $0x8] sm:$0xff]
  %v20 = vld [vmem:[%s2 + $0x10] sm:$0xff]
  %v21 = vld [vmem:[%s2 + $0x18] sm:$0xff]
  %v22 = vld [vmem:[%s2 + $0x20] sm:$0xff]
  %v23 = vld [vmem:[%s2 + $0x28] sm:$0xff]
  %v24 = vld [vmem:[%s2 + $0x30] sm:$0xff]
  %v25 = vld [vmem:[%s2 + $0x38] sm:$0xff]
  %v26 = vld [vmem:[%s2 + $0x40] sm:$0xff]
  %v27 = vld [vmem:[%s2 + $0x48] sm:$0xff]
  %v28 = vld [vmem:[%s2 + $0x50] sm:$0xff]
  %v29 = vld [vmem:[%s2 + $0x58] sm:$0xff]
  %v30 = vld [vmem:[%s2 + $0x60] sm:$0xff]
  %v31 = vld [vmem:[%s2 + $0x68] sm:$0xff]
  %v32 = vld [vmem:[%s2 + $0x70] sm:$0xff]
  %v33 = vld [vmem:[%s2 + $0x78] sm:$0xff]
  %v34 = vld [vmem:[%s2 + $0x80] sm:$0xff]
  %v35 = vld [vmem:[%s2 + $0x88] sm:$0xff]
  %v36 = vld [vmem:[%s2 + $0x90] sm:$0xff]
  %v37 = vld [vmem:[%s2 + $0x98] sm:$0xff]
  %v38 = vld [vmem:[%s2 + $0xa0] sm:$0xff]
  %v39 = vld [vmem:[%s2 + $0xa8] sm:$0xff]
  %v40 = vld [vmem:[%s2 + $0xb0] sm:$0xff]
  %v41 = vld [vmem:[%s2 + $0xb8] sm:$0xff]
  %v42 = vld [vmem:[%s2 + $0xc0] sm:$0xff]
  %v43 = vld [vmem:[%s2 + $0xc8] sm:$0xff]
  %v44 = vld [vmem:[%s2 + $0xd0] sm:$0xff]
  %v45 = vld [vmem:[%s2 + $0xd8] sm:$0xff]
  %v46 = vld [vmem:[%s2 + $0xe0] sm:$0xff]
  %v47 = vld [vmem:[%s2 + $0xe8] sm:$0xff]
  %v48 = vld [vmem:[%s2 + $0xf0] sm:$0xff]
  %v49 = vld [vmem:[%s2 + $0xf8] sm:$0xff]
  %v50 = vld [vmem:[%s2 + $0x100] sm:$0xff]
  %v51 = vld [vmem:[%s2 + $0x108] sm:$0xff]
  %v52 = vld [vmem:[%s2 + $0x110] sm:$0xff]
  %v53 = vld [vmem:[%s2 + $0x118] sm:$0xff]
  %v54 = vld [vmem:[%s2 + $0x120] sm:$0xff]
  %v55 = vld [vmem:[%s2 + $0x128] sm:$0xff]
  %v56 = vld [vmem:[%s2 + $0x130] sm:$0xff]
  %v57 = vld [vmem:[%s2 + $0x138] sm:$0xff]
  %v58 = vld [vmem:[%s2 + $0x140] sm:$0xff]
  %v59 = vld [vmem:[%s2 + $0x148] sm:$0xff]
  %v60 = vld [vmem:[%s2 + $0x150] sm:$0xff]
  %v61 = vld [vmem:[%s2 + $0x158] sm:$0xff]
  %v62 = vld [vmem:[%s2 + $0x160] sm:$0xff]
  %v63 = vld [vmem:[%s2 + $0x168] sm:$0xff]
  %v64 = vld [vmem:[%s2 + $0x170] sm:$0xff]
  %v65 = vld [vmem:[%s2 + $0x178] sm:$0xff]
  %v66 = vld [vmem:[%s2 + $0x180] sm:$0xff]
  %v67 = vld [vmem:[%s2 + $0x188] sm:$0xff]
  %v68 = vld [vmem:[%s2 + $0x190] sm:$0xff]
  %v69 = vld [vmem:[%s2 + $0x198] sm:$0xff]
  %v70 = vld [vmem:[%s2 + $0x1a0] sm:$0xff]
  %v71 = vld [vmem:[%s2 + $0x1a8] sm:$0xff]
  %v72 = vld [vmem:[%s2 + $0x1b0] sm:$0xff]
  %v73 = vld [vmem:[%s2 + $0x1b8] sm:$0xff]
  %v74 = vld [vmem:[%s2 + $0x1c0] sm:$0xff]
  %v75 = vld [vmem:[%s2 + $0x1c8] sm:$0xff]
  %v76 = vld [vmem:[%s2 + $0x1d0] sm:$0xff]
  %v77 = vld [vmem:[%s2 + $0x1d8] sm:$0xff]
  %v78 = vld [vmem:[%s2 + $0x1e0] sm:$0xff]
  %v79 = vld [vmem:[%s2 + $0x1e8] sm:$0xff]
  %v80 = vld [vmem:[%s2 + $0x1f0] sm:$0xff]
  %v81 = vld [vmem:[%s2 + $0x1f8] sm:$0xff]
  %v82 = vunpack.c.l.bf16 %v18
  %v83 = vunpack.c.h.bf16 %v18
  %v84 = vunpack.c.l.bf16 %v19
  %v85 = vunpack.c.h.bf16 %v19
  %v86 = vunpack.c.l.bf16 %v20
  %v87 = vunpack.c.h.bf16 %v20
  %v88 = vunpack.c.l.bf16 %v21
  %v89 = vunpack.c.h.bf16 %v21
  %v90 = vunpack.c.l.bf16 %v22
  %v91 = vunpack.c.h.bf16 %v22
  %v92 = vunpack.c.l.bf16 %v23
  %v93 = vunpack.c.h.bf16 %v23
  %v94 = vunpack.c.l.bf16 %v24
  %v95 = vunpack.c.h.bf16 %v24
  %v96 = vunpack.c.l.bf16 %v25
  %v97 = vunpack.c.h.bf16 %v25
  %v98 = vunpack.c.l.bf16 %v26
  %v99 = vunpack.c.h.bf16 %v26
  %v100 = vunpack.c.l.bf16 %v27
  %v101 = vunpack.c.h.bf16 %v27
  %v102 = vunpack.c.l.bf16 %v28
  %v103 = vunpack.c.h.bf16 %v28
  %v104 = vunpack.c.l.bf16 %v29
  %v105 = vunpack.c.h.bf16 %v29
  %v106 = vunpack.c.l.bf16 %v30
  %v107 = vunpack.c.h.bf16 %v30
  %v108 = vunpack.c.l.bf16 %v31
  %v109 = vunpack.c.h.bf16 %v31
  %v110 = vunpack.c.l.bf16 %v32
  %v111 = vunpack.c.h.bf16 %v32
  %v112 = vunpack.c.l.bf16 %v33
  %v113 = vunpack.c.h.bf16 %v33
  %v114 = vunpack.c.l.bf16 %v34
  %v115 = vunpack.c.h.bf16 %v34
  %v116 = vunpack.c.l.bf16 %v35
  %v117 = vunpack.c.h.bf16 %v35
  %v118 = vunpack.c.l.bf16 %v36
  %v119 = vunpack.c.h.bf16 %v36
  %v120 = vunpack.c.l.bf16 %v37
  %v121 = vunpack.c.h.bf16 %v37
  %v122 = vunpack.c.l.bf16 %v38
  %v123 = vunpack.c.h.bf16 %v38
  %v124 = vunpack.c.l.bf16 %v39
  %v125 = vunpack.c.h.bf16 %v39
  %v126 = vunpack.c.l.bf16 %v40
  %v127 = vunpack.c.h.bf16 %v40
  %v128 = vunpack.c.l.bf16 %v41
  %v129 = vunpack.c.h.bf16 %v41
  %v130 = vunpack.c.l.bf16 %v42
  %v131 = vunpack.c.h.bf16 %v42
  %v132 = vunpack.c.l.bf16 %v43
  %v133 = vunpack.c.h.bf16 %v43
  %v134 = vunpack.c.l.bf16 %v44
  %v135 = vunpack.c.h.bf16 %v44
  %v136 = vunpack.c.l.bf16 %v45
  %v137 = vunpack.c.h.bf16 %v45
  %v138 = vunpack.c.l.bf16 %v46
  %v139 = vunpack.c.h.bf16 %v46
  %v140 = vunpack.c.l.bf16 %v47
  %v141 = vunpack.c.h.bf16 %v47
  %v142 = vunpack.c.l.bf16 %v48
  %v143 = vunpack.c.h.bf16 %v48
  %v144 = vunpack.c.l.bf16 %v49
  %v145 = vunpack.c.h.bf16 %v49
  %v146 = vunpack.c.l.bf16 %v50
  %v147 = vunpack.c.h.bf16 %v50
  %v148 = vunpack.c.l.bf16 %v51
  %v149 = vunpack.c.h.bf16 %v51
  %v150 = vunpack.c.l.bf16 %v52
  %v151 = vunpack.c.h.bf16 %v52
  %v152 = vunpack.c.l.bf16 %v53
  %v153 = vunpack.c.h.bf16 %v53
  %v154 = vunpack.c.l.bf16 %v54
  %v155 = vunpack.c.h.bf16 %v54
  %v156 = vunpack.c.l.bf16 %v55
  %v157 = vunpack.c.h.bf16 %v55
  %v158 = vunpack.c.l.bf16 %v56
  %v159 = vunpack.c.h.bf16 %v56
  %v160 = vunpack.c.l.bf16 %v57
  %v161 = vunpack.c.h.bf16 %v57
  %v162 = vunpack.c.l.bf16 %v58
  %v163 = vunpack.c.h.bf16 %v58
  %v164 = vunpack.c.l.bf16 %v59
  %v165 = vunpack.c.h.bf16 %v59
  %v166 = vunpack.c.l.bf16 %v60
  %v167 = vunpack.c.h.bf16 %v60
  %v168 = vunpack.c.l.bf16 %v61
  %v169 = vunpack.c.h.bf16 %v61
  %v170 = vunpack.c.l.bf16 %v62
  %v171 = vunpack.c.h.bf16 %v62
  %v172 = vunpack.c.l.bf16 %v63
  %v173 = vunpack.c.h.bf16 %v63
  %v174 = vunpack.c.l.bf16 %v64
  %v175 = vunpack.c.h.bf16 %v64
  %v176 = vunpack.c.l.bf16 %v65
  %v177 = vunpack.c.h.bf16 %v65
  %v178 = vunpack.c.l.bf16 %v66
  %v179 = vunpack.c.h.bf16 %v66
  %v180 = vunpack.c.l.bf16 %v67
  %v181 = vunpack.c.h.bf16 %v67
  %v182 = vunpack.c.l.bf16 %v68
  %v183 = vunpack.c.h.bf16 %v68
  %v184 = vunpack.c.l.bf16 %v69
  %v185 = vunpack.c.h.bf16 %v69
  %v186 = vunpack.c.l.bf16 %v70
  %v187 = vunpack.c.h.bf16 %v70
  %v188 = vunpack.c.l.bf16 %v71
  %v189 = vunpack.c.h.bf16 %v71
  %v190 = vunpack.c.l.bf16 %v72
  %v191 = vunpack.c.h.bf16 %v72
  %v192 = vunpack.c.l.bf16 %v73
  %v193 = vunpack.c.h.bf16 %v73
  %v194 = vunpack.c.l.bf16 %v74
  %v195 = vunpack.c.h.bf16 %v74
  %v196 = vunpack.c.l.bf16 %v75
  %v197 = vunpack.c.h.bf16 %v75
  %v198 = vunpack.c.l.bf16 %v76
  %v199 = vunpack.c.h.bf16 %v76
  %v200 = vunpack.c.l.bf16 %v77
  %v201 = vunpack.c.h.bf16 %v77
  %v202 = vunpack.c.l.bf16 %v78
  %v203 = vunpack.c.h.bf16 %v78
  %v204 = vunpack.c.l.bf16 %v79
  %v205 = vunpack.c.h.bf16 %v79
  %v206 = vunpack.c.l.bf16 %v80
  %v207 = vunpack.c.h.bf16 %v80
  %v208 = vunpack.c.l.bf16 %v81
  %v209 = vunpack.c.h.bf16 %v81
  %v210 = vmul.f32 %v82, %v82
  %v211 = vmul.f32 %v83, %v83
  %v212 = vmul.f32 %v84, %v84
  %v213 = vmul.f32 %v85, %v85
  %v214 = vmul.f32 %v86, %v86
  %v215 = vmul.f32 %v87, %v87
  %v216 = vmul.f32 %v88, %v88
  %v217 = vmul.f32 %v89, %v89
  %v218 = vmul.f32 %v90, %v90
  %v219 = vmul.f32 %v91, %v91
  %v220 = vmul.f32 %v92, %v92
  %v221 = vmul.f32 %v93, %v93
  %v222 = vmul.f32 %v94, %v94
  %v223 = vmul.f32 %v95, %v95
  %v224 = vmul.f32 %v96, %v96
  %v225 = vmul.f32 %v97, %v97
  %v226 = vmul.f32 %v98, %v98
  %v227 = vmul.f32 %v99, %v99
  %v228 = vmul.f32 %v100, %v100
  %v229 = vmul.f32 %v101, %v101
  %v230 = vmul.f32 %v102, %v102
  %v231 = vmul.f32 %v103, %v103
  %v232 = vmul.f32 %v104, %v104
  %v233 = vmul.f32 %v105, %v105
  %v234 = vmul.f32 %v106, %v106
  %v235 = vmul.f32 %v107, %v107
  %v236 = vmul.f32 %v108, %v108
  %v237 = vmul.f32 %v109, %v109
  %v238 = vmul.f32 %v110, %v110
  %v239 = vmul.f32 %v111, %v111
  %v240 = vmul.f32 %v112, %v112
  %v241 = vmul.f32 %v113, %v113
  %v242 = vmul.f32 %v114, %v114
  %v243 = vmul.f32 %v115, %v115
  %v244 = vmul.f32 %v116, %v116
  %v245 = vmul.f32 %v117, %v117
  %v246 = vmul.f32 %v118, %v118
  %v247 = vmul.f32 %v119, %v119
  %v248 = vmul.f32 %v120, %v120
  %v249 = vmul.f32 %v121, %v121
  %v250 = vmul.f32 %v122, %v122
  %v251 = vmul.f32 %v123, %v123
  %v252 = vmul.f32 %v124, %v124
  %v253 = vmul.f32 %v125, %v125
  %v254 = vmul.f32 %v126, %v126
  %v255 = vmul.f32 %v127, %v127
  %v256 = vmul.f32 %v128, %v128
  %v257 = vmul.f32 %v129, %v129
  %v258 = vmul.f32 %v130, %v130
  %v259 = vmul.f32 %v131, %v131
  %v260 = vmul.f32 %v132, %v132
  %v261 = vmul.f32 %v133, %v133
  %v262 = vmul.f32 %v134, %v134
  %v263 = vmul.f32 %v135, %v135
  %v264 = vmul.f32 %v136, %v136
  %v265 = vmul.f32 %v137, %v137
  %v266 = vmul.f32 %v138, %v138
  %v267 = vmul.f32 %v139, %v139
  %v268 = vmul.f32 %v140, %v140
  %v269 = vmul.f32 %v141, %v141
  %v270 = vmul.f32 %v142, %v142
  %v271 = vmul.f32 %v143, %v143
  %v272 = vmul.f32 %v144, %v144
  %v273 = vmul.f32 %v145, %v145
  %v274 = vmul.f32 %v146, %v146
  %v275 = vmul.f32 %v147, %v147
  %v276 = vmul.f32 %v148, %v148
  %v277 = vmul.f32 %v149, %v149
  %v278 = vmul.f32 %v150, %v150
  %v279 = vmul.f32 %v151, %v151
  %v280 = vmul.f32 %v152, %v152
  %v281 = vmul.f32 %v153, %v153
  %v282 = vmul.f32 %v154, %v154
  %v283 = vmul.f32 %v155, %v155
  %v284 = vmul.f32 %v156, %v156
  %v285 = vmul.f32 %v157, %v157
  %v286 = vmul.f32 %v158, %v158
  %v287 = vmul.f32 %v159, %v159
  %v288 = vmul.f32 %v160, %v160
  %v289 = vmul.f32 %v161, %v161
  %v290 = vmul.f32 %v162, %v162
  %v291 = vmul.f32 %v163, %v163
  %v292 = vmul.f32 %v164, %v164
  %v293 = vmul.f32 %v165, %v165
  %v294 = vmul.f32 %v166, %v166
  %v295 = vmul.f32 %v167, %v167
  %v296 = vmul.f32 %v168, %v168
  %v297 = vmul.f32 %v169, %v169
  %v298 = vmul.f32 %v170, %v170
  %v299 = vmul.f32 %v171, %v171
  %v300 = vmul.f32 %v172, %v172
  %v301 = vmul.f32 %v173, %v173
  %v302 = vmul.f32 %v174, %v174
  %v303 = vmul.f32 %v175, %v175
  %v304 = vmul.f32 %v176, %v176
  %v305 = vmul.f32 %v177, %v177
  %v306 = vmul.f32 %v178, %v178
  %v307 = vmul.f32 %v179, %v179
  %v308 = vmul.f32 %v180, %v180
  %v309 = vmul.f32 %v181, %v181
  %v310 = vmul.f32 %v182, %v182
  %v311 = vmul.f32 %v183, %v183
  %v312 = vmul.f32 %v184, %v184
  %v313 = vmul.f32 %v185, %v185
  %v314 = vmul.f32 %v186, %v186
  %v315 = vmul.f32 %v187, %v187
  %v316 = vmul.f32 %v188, %v188
  %v317 = vmul.f32 %v189, %v189
  %v318 = vmul.f32 %v190, %v190
  %v319 = vmul.f32 %v191, %v191
  %v320 = vmul.f32 %v192, %v192
  %v321 = vmul.f32 %v193, %v193
  %v322 = vmul.f32 %v194, %v194
  %v323 = vmul.f32 %v195, %v195
  %v324 = vmul.f32 %v196, %v196
  %v325 = vmul.f32 %v197, %v197
  %v326 = vmul.f32 %v198, %v198
  %v327 = vmul.f32 %v199, %v199
  %v328 = vmul.f32 %v200, %v200
  %v329 = vmul.f32 %v201, %v201
  %v330 = vmul.f32 %v202, %v202
  %v331 = vmul.f32 %v203, %v203
  %v332 = vmul.f32 %v204, %v204
  %v333 = vmul.f32 %v205, %v205
  %v334 = vmul.f32 %v206, %v206
  %v335 = vmul.f32 %v207, %v207
  %v336 = vmul.f32 %v208, %v208
  %v337 = vmul.f32 %v209, %v209
  %v338 = vadd.f32 %v210, %v218
  %v339 = vadd.f32 %v338, %v226
  %v340 = vadd.f32 %v339, %v234
  %v341 = vadd.f32 %v340, %v242
  %v342 = vadd.f32 %v341, %v250
  %v343 = vadd.f32 %v342, %v258
  %v344 = vadd.f32 %v343, %v266
  %v345 = vadd.f32 %v344, %v274
  %v346 = vadd.f32 %v345, %v282
  %v347 = vadd.f32 %v346, %v290
  %v348 = vadd.f32 %v347, %v298
  %v349 = vadd.f32 %v348, %v306
  %v350 = vadd.f32 %v349, %v314
  %v351 = vadd.f32 %v350, %v322
  %v352 = vadd.f32 %v351, %v330
  %v353 = vrot.slane %v352, 4
  %v354 = vadd.f32 %v352, %v353
  %v355 = vrot.slane %v354, 2
  %v356 = vadd.f32 %v354, %v355
  %v357 = vrot.slane %v356, 1
  %v358 = vadd.f32 %v356, %v357
  %v359 = vadd.f32 %v211, %v219
  %v360 = vadd.f32 %v359, %v227
  %v361 = vadd.f32 %v360, %v235
  %v362 = vadd.f32 %v361, %v243
  %v363 = vadd.f32 %v362, %v251
  %v364 = vadd.f32 %v363, %v259
  %v365 = vadd.f32 %v364, %v267
  %v366 = vadd.f32 %v365, %v275
  %v367 = vadd.f32 %v366, %v283
  %v368 = vadd.f32 %v367, %v291
  %v369 = vadd.f32 %v368, %v299
  %v370 = vadd.f32 %v369, %v307
  %v371 = vadd.f32 %v370, %v315
  %v372 = vadd.f32 %v371, %v323
  %v373 = vadd.f32 %v372, %v331
  %v374 = vrot.slane %v373, 4
  %v375 = vadd.f32 %v373, %v374
  %v376 = vrot.slane %v375, 2
  %v377 = vadd.f32 %v375, %v376
  %v378 = vrot.slane %v377, 1
  %v379 = vadd.f32 %v377, %v378
  %v380 = vadd.f32 %v212, %v220
  %v381 = vadd.f32 %v380, %v228
  %v382 = vadd.f32 %v381, %v236
  %v383 = vadd.f32 %v382, %v244
  %v384 = vadd.f32 %v383, %v252
  %v385 = vadd.f32 %v384, %v260
  %v386 = vadd.f32 %v385, %v268
  %v387 = vadd.f32 %v386, %v276
  %v388 = vadd.f32 %v387, %v284
  %v389 = vadd.f32 %v388, %v292
  %v390 = vadd.f32 %v389, %v300
  %v391 = vadd.f32 %v390, %v308
  %v392 = vadd.f32 %v391, %v316
  %v393 = vadd.f32 %v392, %v324
  %v394 = vadd.f32 %v393, %v332
  %v395 = vrot.slane %v394, 4
  %v396 = vadd.f32 %v394, %v395
  %v397 = vrot.slane %v396, 2
  %v398 = vadd.f32 %v396, %v397
  %v399 = vrot.slane %v398, 1
  %v400 = vadd.f32 %v398, %v399
  %v401 = vadd.f32 %v213, %v221
  %v402 = vadd.f32 %v401, %v229
  %v403 = vadd.f32 %v402, %v237
  %v404 = vadd.f32 %v403, %v245
  %v405 = vadd.f32 %v404, %v253
  %v406 = vadd.f32 %v405, %v261
  %v407 = vadd.f32 %v406, %v269
  %v408 = vadd.f32 %v407, %v277
  %v409 = vadd.f32 %v408, %v285
  %v410 = vadd.f32 %v409, %v293
  %v411 = vadd.f32 %v410, %v301
  %v412 = vadd.f32 %v411, %v309
  %v413 = vadd.f32 %v412, %v317
  %v414 = vadd.f32 %v413, %v325
  %v415 = vadd.f32 %v414, %v333
  %v416 = vrot.slane %v415, 4
  %v417 = vadd.f32 %v415, %v416
  %v418 = vrot.slane %v417, 2
  %v419 = vadd.f32 %v417, %v418
  %v420 = vrot.slane %v419, 1
  %v421 = vadd.f32 %v419, %v420
  %v422 = vadd.f32 %v214, %v222
  %v423 = vadd.f32 %v422, %v230
  %v424 = vadd.f32 %v423, %v238
  %v425 = vadd.f32 %v424, %v246
  %v426 = vadd.f32 %v425, %v254
  %v427 = vadd.f32 %v426, %v262
  %v428 = vadd.f32 %v427, %v270
  %v429 = vadd.f32 %v428, %v278
  %v430 = vadd.f32 %v429, %v286
  %v431 = vadd.f32 %v430, %v294
  %v432 = vadd.f32 %v431, %v302
  %v433 = vadd.f32 %v432, %v310
  %v434 = vadd.f32 %v433, %v318
  %v435 = vadd.f32 %v434, %v326
  %v436 = vadd.f32 %v435, %v334
  %v437 = vrot.slane %v436, 4
  %v438 = vadd.f32 %v436, %v437
  %v439 = vrot.slane %v438, 2
  %v440 = vadd.f32 %v438, %v439
  %v441 = vrot.slane %v440, 1
  %v442 = vadd.f32 %v440, %v441
  %v443 = vadd.f32 %v215, %v223
  %v444 = vadd.f32 %v443, %v231
  %v445 = vadd.f32 %v444, %v239
  %v446 = vadd.f32 %v445, %v247
  %v447 = vadd.f32 %v446, %v255
  %v448 = vadd.f32 %v447, %v263
  %v449 = vadd.f32 %v448, %v271
  %v450 = vadd.f32 %v449, %v279
  %v451 = vadd.f32 %v450, %v287
  %v452 = vadd.f32 %v451, %v295
  %v453 = vadd.f32 %v452, %v303
  %v454 = vadd.f32 %v453, %v311
  %v455 = vadd.f32 %v454, %v319
  %v456 = vadd.f32 %v455, %v327
  %v457 = vadd.f32 %v456, %v335
  %v458 = vrot.slane %v457, 4
  %v459 = vadd.f32 %v457, %v458
  %v460 = vrot.slane %v459, 2
  %v461 = vadd.f32 %v459, %v460
  %v462 = vrot.slane %v461, 1
  %v463 = vadd.f32 %v461, %v462
  %v464 = vadd.f32 %v216, %v224
  %v465 = vadd.f32 %v464, %v232
  %v466 = vadd.f32 %v465, %v240
  %v467 = vadd.f32 %v466, %v248
  %v468 = vadd.f32 %v467, %v256
  %v469 = vadd.f32 %v468, %v264
  %v470 = vadd.f32 %v469, %v272
  %v471 = vadd.f32 %v470, %v280
  %v472 = vadd.f32 %v471, %v288
  %v473 = vadd.f32 %v472, %v296
  %v474 = vadd.f32 %v473, %v304
  %v475 = vadd.f32 %v474, %v312
  %v476 = vadd.f32 %v475, %v320
  %v477 = vadd.f32 %v476, %v328
  %v478 = vadd.f32 %v477, %v336
  %v479 = vrot.slane %v478, 4
  %v480 = vadd.f32 %v478, %v479
  %v481 = vrot.slane %v480, 2
  %v482 = vadd.f32 %v480, %v481
  %v483 = vrot.slane %v482, 1
  %v484 = vadd.f32 %v482, %v483
  %v485 = vadd.f32 %v217, %v225
  %v486 = vadd.f32 %v485, %v233
  %v487 = vadd.f32 %v486, %v241
  %v488 = vadd.f32 %v487, %v249
  %v489 = vadd.f32 %v488, %v257
  %v490 = vadd.f32 %v489, %v265
  %v491 = vadd.f32 %v490, %v273
  %v492 = vadd.f32 %v491, %v281
  %v493 = vadd.f32 %v492, %v289
  %v494 = vadd.f32 %v493, %v297
  %v495 = vadd.f32 %v494, %v305
  %v496 = vadd.f32 %v495, %v313
  %v497 = vadd.f32 %v496, %v321
  %v498 = vadd.f32 %v497, %v329
  %v499 = vadd.f32 %v498, %v337
  %v500 = vrot.slane %v499, 4
  %v501 = vadd.f32 %v499, %v500
  %v502 = vrot.slane %v501, 2
  %v503 = vadd.f32 %v501, %v502
  %v504 = vrot.slane %v503, 1
  %v505 = vadd.f32 %v503, %v504
  %v506 = vmax.f32 %v358, 1e-24
  %v507 = vmax.f32 %v379, 1e-24
  %v508 = vmax.f32 %v400, 1e-24
  %v509 = vmax.f32 %v421, 1e-24
  %v510 = vmax.f32 %v442, 1e-24
  %v511 = vmax.f32 %v463, 1e-24
  %v512 = vmax.f32 %v484, 1e-24
  %v513 = vmax.f32 %v505, 1e-24
  %v514 = vrsqrt.pop %v506
  %v515 = vmul.f32 %v514, %v506
  %v516 = vmul.f32 %v515, %v514
  %v517 = vmul.f32 0.5, %v516
  %v518 = vsub.f32 1.5, %v517
  %v519 = vmul.f32 %v514, %v518
  %vm520 = vweird.f32 %v506
  %vm521 = vweird.f32 %v514
  %vm522 = vmor %vm520, %vm521
  %v523 = vsel %vm522, %v514, %v519
  %v524 = vrsqrt.pop %v507
  %v525 = vmul.f32 %v524, %v507
  %v526 = vmul.f32 %v525, %v524
  %v527 = vmul.f32 0.5, %v526
  %v528 = vsub.f32 1.5, %v527
  %v529 = vmul.f32 %v524, %v528
  %vm530 = vweird.f32 %v507
  %vm531 = vweird.f32 %v524
  %vm532 = vmor %vm530, %vm531
  %v533 = vsel %vm532, %v524, %v529
  %v534 = vrsqrt.pop %v508
  %v535 = vmul.f32 %v534, %v508
  %v536 = vmul.f32 %v535, %v534
  %v537 = vmul.f32 0.5, %v536
  %v538 = vsub.f32 1.5, %v537
  %v539 = vmul.f32 %v534, %v538
  %vm540 = vweird.f32 %v508
  %vm541 = vweird.f32 %v534
  %vm542 = vmor %vm540, %vm541
  %v543 = vsel %vm542, %v534, %v539
  %v544 = vrsqrt.pop %v509
  %v545 = vmul.f32 %v544, %v509
  %v546 = vmul.f32 %v545, %v544
  %v547 = vmul.f32 0.5, %v546
  %v548 = vsub.f32 1.5, %v547
  %v549 = vmul.f32 %v544, %v548
  %vm550 = vweird.f32 %v509
  %vm551 = vweird.f32 %v544
  %vm552 = vmor %vm550, %vm551
  %v553 = vsel %vm552, %v544, %v549
  %v554 = vrsqrt.pop %v510
  %v555 = vmul.f32 %v554, %v510
  %v556 = vmul.f32 %v555, %v554
  %v557 = vmul.f32 0.5, %v556
  %v558 = vsub.f32 1.5, %v557
  %v559 = vmul.f32 %v554, %v558
  %vm560 = vweird.f32 %v510
  %vm561 = vweird.f32 %v554
  %vm562 = vmor %vm560, %vm561
  %v563 = vsel %vm562, %v554, %v559
  %v564 = vrsqrt.pop %v511
  %v565 = vmul.f32 %v564, %v511
  %v566 = vmul.f32 %v565, %v564
  %v567 = vmul.f32 0.5, %v566
  %v568 = vsub.f32 1.5, %v567
  %v569 = vmul.f32 %v564, %v568
  %vm570 = vweird.f32 %v511
  %vm571 = vweird.f32 %v564
  %vm572 = vmor %vm570, %vm571
  %v573 = vsel %vm572, %v564, %v569
  %v574 = vrsqrt.pop %v512
  %v575 = vmul.f32 %v574, %v512
  %v576 = vmul.f32 %v575, %v574
  %v577 = vmul.f32 0.5, %v576
  %v578 = vsub.f32 1.5, %v577
  %v579 = vmul.f32 %v574, %v578
  %vm580 = vweird.f32 %v512
  %vm581 = vweird.f32 %v574
  %vm582 = vmor %vm580, %vm581
  %v583 = vsel %vm582, %v574, %v579
  %v584 = vrsqrt.pop %v513
  %v585 = vmul.f32 %v584, %v513
  %v586 = vmul.f32 %v585, %v584
  %v587 = vmul.f32 0.5, %v586
  %v588 = vsub.f32 1.5, %v587
  %v589 = vmul.f32 %v584, %v588
  %vm590 = vweird.f32 %v513
  %vm591 = vweird.f32 %v584
  %vm592 = vmor %vm590, %vm591
  %v593 = vsel %vm592, %v584, %v589
  %v596 = vunpack.c.l.b16 %v16
  %v597 = vunpack.c.l.b16 %v17
  %v598 = vpack.c.b16 %v597, %v596
  %v664 = vunpack.c.l.b16 %v18
  %v665 = vunpack.c.h.b16 %v18
  %v666 = vunpack.c.l.b16 %v19
  %v667 = vunpack.c.h.b16 %v19
  %v668 = vunpack.c.l.b16 %v20
  %v669 = vunpack.c.h.b16 %v20
  %v670 = vunpack.c.l.b16 %v21
  %v671 = vunpack.c.h.b16 %v21
  %v672 = vunpack.c.l.b16 %v22
  %v673 = vunpack.c.h.b16 %v22
  %v674 = vunpack.c.l.b16 %v23
  %v675 = vunpack.c.h.b16 %v23
  %v676 = vunpack.c.l.b16 %v24
  %v677 = vunpack.c.h.b16 %v24
  %v678 = vunpack.c.l.b16 %v25
  %v679 = vunpack.c.h.b16 %v25
  %v680 = vunpack.c.l.b16 %v26
  %v681 = vunpack.c.h.b16 %v26
  %v682 = vunpack.c.l.b16 %v27
  %v683 = vunpack.c.h.b16 %v27
  %v684 = vunpack.c.l.b16 %v28
  %v685 = vunpack.c.h.b16 %v28
  %v686 = vunpack.c.l.b16 %v29
  %v687 = vunpack.c.h.b16 %v29
  %v688 = vunpack.c.l.b16 %v30
  %v689 = vunpack.c.h.b16 %v30
  %v690 = vunpack.c.l.b16 %v31
  %v691 = vunpack.c.h.b16 %v31
  %v692 = vunpack.c.l.b16 %v32
  %v693 = vunpack.c.h.b16 %v32
  %v694 = vunpack.c.l.b16 %v33
  %v695 = vunpack.c.h.b16 %v33
  %v696 = vunpack.c.l.b16 %v34
  %v697 = vunpack.c.h.b16 %v34
  %v698 = vunpack.c.l.b16 %v35
  %v699 = vunpack.c.h.b16 %v35
  %v700 = vunpack.c.l.b16 %v36
  %v701 = vunpack.c.h.b16 %v36
  %v702 = vunpack.c.l.b16 %v37
  %v703 = vunpack.c.h.b16 %v37
  %v704 = vunpack.c.l.b16 %v38
  %v705 = vunpack.c.h.b16 %v38
  %v706 = vunpack.c.l.b16 %v39
  %v707 = vunpack.c.h.b16 %v39
  %v708 = vunpack.c.l.b16 %v40
  %v709 = vunpack.c.h.b16 %v40
  %v710 = vunpack.c.l.b16 %v41
  %v711 = vunpack.c.h.b16 %v41
  %v712 = vunpack.c.l.b16 %v42
  %v713 = vunpack.c.h.b16 %v42
  %v714 = vunpack.c.l.b16 %v43
  %v715 = vunpack.c.h.b16 %v43
  %v716 = vunpack.c.l.b16 %v44
  %v717 = vunpack.c.h.b16 %v44
  %v718 = vunpack.c.l.b16 %v45
  %v719 = vunpack.c.h.b16 %v45
  %v720 = vunpack.c.l.b16 %v46
  %v721 = vunpack.c.h.b16 %v46
  %v722 = vunpack.c.l.b16 %v47
  %v723 = vunpack.c.h.b16 %v47
  %v724 = vunpack.c.l.b16 %v48
  %v725 = vunpack.c.h.b16 %v48
  %v726 = vunpack.c.l.b16 %v49
  %v727 = vunpack.c.h.b16 %v49
  %v728 = vunpack.c.l.b16 %v50
  %v729 = vunpack.c.h.b16 %v50
  %v730 = vunpack.c.l.b16 %v51
  %v731 = vunpack.c.h.b16 %v51
  %v732 = vunpack.c.l.b16 %v52
  %v733 = vunpack.c.h.b16 %v52
  %v734 = vunpack.c.l.b16 %v53
  %v735 = vunpack.c.h.b16 %v53
  %v736 = vunpack.c.l.b16 %v54
  %v737 = vunpack.c.h.b16 %v54
  %v738 = vunpack.c.l.b16 %v55
  %v739 = vunpack.c.h.b16 %v55
  %v740 = vunpack.c.l.b16 %v56
  %v741 = vunpack.c.h.b16 %v56
  %v742 = vunpack.c.l.b16 %v57
  %v743 = vunpack.c.h.b16 %v57
  %v744 = vunpack.c.l.b16 %v58
  %v745 = vunpack.c.h.b16 %v58
  %v746 = vunpack.c.l.b16 %v59
  %v747 = vunpack.c.h.b16 %v59
  %v748 = vunpack.c.l.b16 %v60
  %v749 = vunpack.c.h.b16 %v60
  %v750 = vunpack.c.l.b16 %v61
  %v751 = vunpack.c.h.b16 %v61
  %v752 = vunpack.c.l.b16 %v62
  %v753 = vunpack.c.h.b16 %v62
  %v754 = vunpack.c.l.b16 %v63
  %v755 = vunpack.c.h.b16 %v63
  %v756 = vunpack.c.l.b16 %v64
  %v757 = vunpack.c.h.b16 %v64
  %v758 = vunpack.c.l.b16 %v65
  %v759 = vunpack.c.h.b16 %v65
  %v760 = vunpack.c.l.b16 %v66
  %v761 = vunpack.c.h.b16 %v66
  %v762 = vunpack.c.l.b16 %v67
  %v763 = vunpack.c.h.b16 %v67
  %v764 = vunpack.c.l.b16 %v68
  %v765 = vunpack.c.h.b16 %v68
  %v766 = vunpack.c.l.b16 %v69
  %v767 = vunpack.c.h.b16 %v69
  %v768 = vunpack.c.l.b16 %v70
  %v769 = vunpack.c.h.b16 %v70
  %v770 = vunpack.c.l.b16 %v71
  %v771 = vunpack.c.h.b16 %v71
  %v772 = vunpack.c.l.b16 %v72
  %v773 = vunpack.c.h.b16 %v72
  %v774 = vunpack.c.l.b16 %v73
  %v775 = vunpack.c.h.b16 %v73
  %v776 = vunpack.c.l.b16 %v74
  %v777 = vunpack.c.h.b16 %v74
  %v778 = vunpack.c.l.b16 %v75
  %v779 = vunpack.c.h.b16 %v75
  %v780 = vunpack.c.l.b16 %v76
  %v781 = vunpack.c.h.b16 %v76
  %v782 = vunpack.c.l.b16 %v77
  %v783 = vunpack.c.h.b16 %v77
  %v784 = vunpack.c.l.b16 %v78
  %v785 = vunpack.c.h.b16 %v78
  %v786 = vunpack.c.l.b16 %v79
  %v787 = vunpack.c.h.b16 %v79
  %v788 = vunpack.c.l.b16 %v80
  %v789 = vunpack.c.h.b16 %v80
  %v790 = vunpack.c.l.b16 %v81
  %v791 = vunpack.c.h.b16 %v81
  %v792 = vpack.c.b16 %v672, %v664
  %v793 = vpack.c.b16 %v673, %v665
  %v794 = vpack.c.b16 %v674, %v666
  %v795 = vpack.c.b16 %v675, %v667
  %v796 = vpack.c.b16 %v676, %v668
  %v797 = vpack.c.b16 %v677, %v669
  %v798 = vpack.c.b16 %v678, %v670
  %v799 = vpack.c.b16 %v679, %v671
  %v800 = vpack.c.b16 %v688, %v680
  %v801 = vpack.c.b16 %v689, %v681
  %v802 = vpack.c.b16 %v690, %v682
  %v803 = vpack.c.b16 %v691, %v683
  %v804 = vpack.c.b16 %v692, %v684
  %v805 = vpack.c.b16 %v693, %v685
  %v806 = vpack.c.b16 %v694, %v686
  %v807 = vpack.c.b16 %v695, %v687
  %v808 = vpack.c.b16 %v704, %v696
  %v809 = vpack.c.b16 %v705, %v697
  %v810 = vpack.c.b16 %v706, %v698
  %v811 = vpack.c.b16 %v707, %v699
  %v812 = vpack.c.b16 %v708, %v700
  %v813 = vpack.c.b16 %v709, %v701
  %v814 = vpack.c.b16 %v710, %v702
  %v815 = vpack.c.b16 %v711, %v703
  %v816 = vpack.c.b16 %v720, %v712
  %v817 = vpack.c.b16 %v721, %v713
  %v818 = vpack.c.b16 %v722, %v714
  %v819 = vpack.c.b16 %v723, %v715
  %v820 = vpack.c.b16 %v724, %v716
  %v821 = vpack.c.b16 %v725, %v717
  %v822 = vpack.c.b16 %v726, %v718
  %v823 = vpack.c.b16 %v727, %v719
  %v824 = vpack.c.b16 %v736, %v728
  %v825 = vpack.c.b16 %v737, %v729
  %v826 = vpack.c.b16 %v738, %v730
  %v827 = vpack.c.b16 %v739, %v731
  %v828 = vpack.c.b16 %v740, %v732
  %v829 = vpack.c.b16 %v741, %v733
  %v830 = vpack.c.b16 %v742, %v734
  %v831 = vpack.c.b16 %v743, %v735
  %v832 = vpack.c.b16 %v752, %v744
  %v833 = vpack.c.b16 %v753, %v745
  %v834 = vpack.c.b16 %v754, %v746
  %v835 = vpack.c.b16 %v755, %v747
  %v836 = vpack.c.b16 %v756, %v748
  %v837 = vpack.c.b16 %v757, %v749
  %v838 = vpack.c.b16 %v758, %v750
  %v839 = vpack.c.b16 %v759, %v751
  %v840 = vpack.c.b16 %v768, %v760
  %v841 = vpack.c.b16 %v769, %v761
  %v842 = vpack.c.b16 %v770, %v762
  %v843 = vpack.c.b16 %v771, %v763
  %v844 = vpack.c.b16 %v772, %v764
  %v845 = vpack.c.b16 %v773, %v765
  %v846 = vpack.c.b16 %v774, %v766
  %v847 = vpack.c.b16 %v775, %v767
  %v848 = vpack.c.b16 %v784, %v776
  %v849 = vpack.c.b16 %v785, %v777
  %v850 = vpack.c.b16 %v786, %v778
  %v851 = vpack.c.b16 %v787, %v779
  %v852 = vpack.c.b16 %v788, %v780
  %v853 = vpack.c.b16 %v789, %v781
  %v854 = vpack.c.b16 %v790, %v782
  %v855 = vpack.c.b16 %v791, %v783
  %920 = vmatpush.bf16.msra.mxu0 %v848
  %921 = vmatpush.bf16.msra.mxu0 %v840
  %922 = vmatpush.bf16.msra.mxu0 %v832
  %923 = vmatpush.bf16.msra.mxu0 %v824
  %924 = vmatpush.bf16.msra.mxu0 %v816
  %925 = vmatpush.bf16.msra.mxu0 %v808
  %926 = vmatpush.bf16.msra.mxu0 %v800
  %927 = vmatpush.bf16.msra.mxu0 %v792
  %928 = vmatmul.bf16.gmra.mxu0 %v598
  %v929 = vpop.f32.mrf.mxu0
  %v930 = vadd.f32 0.0, %v929
  %v931 = vpop.f32.mrf.mxu0
  %v932 = vadd.f32 0.0, %v931
  %933 = vdwg.mxu0
  %934 = vmatpush.bf16.msra.mxu0 %v849
  %935 = vmatpush.bf16.msra.mxu0 %v841
  %936 = vmatpush.bf16.msra.mxu0 %v833
  %937 = vmatpush.bf16.msra.mxu0 %v825
  %938 = vmatpush.bf16.msra.mxu0 %v817
  %939 = vmatpush.bf16.msra.mxu0 %v809
  %940 = vmatpush.bf16.msra.mxu0 %v801
  %941 = vmatpush.bf16.msra.mxu0 %v793
  %942 = vmatmul.bf16.gmra.mxu0 %v598
  %v943 = vpop.f32.mrf.mxu0
  %v944 = vadd.f32 0.0, %v943
  %v945 = vpop.f32.mrf.mxu0
  %v946 = vadd.f32 0.0, %v945
  %947 = vdwg.mxu0
  %948 = vmatpush.bf16.msra.mxu0 %v850
  %949 = vmatpush.bf16.msra.mxu0 %v842
  %950 = vmatpush.bf16.msra.mxu0 %v834
  %951 = vmatpush.bf16.msra.mxu0 %v826
  %952 = vmatpush.bf16.msra.mxu0 %v818
  %953 = vmatpush.bf16.msra.mxu0 %v810
  %954 = vmatpush.bf16.msra.mxu0 %v802
  %955 = vmatpush.bf16.msra.mxu0 %v794
  %956 = vmatmul.bf16.gmra.mxu0 %v598
  %v957 = vpop.f32.mrf.mxu0
  %v958 = vadd.f32 0.0, %v957
  %v959 = vpop.f32.mrf.mxu0
  %v960 = vadd.f32 0.0, %v959
  %961 = vdwg.mxu0
  %962 = vmatpush.bf16.msra.mxu0 %v851
  %963 = vmatpush.bf16.msra.mxu0 %v843
  %964 = vmatpush.bf16.msra.mxu0 %v835
  %965 = vmatpush.bf16.msra.mxu0 %v827
  %966 = vmatpush.bf16.msra.mxu0 %v819
  %967 = vmatpush.bf16.msra.mxu0 %v811
  %968 = vmatpush.bf16.msra.mxu0 %v803
  %969 = vmatpush.bf16.msra.mxu0 %v795
  %970 = vmatmul.bf16.gmra.mxu0 %v598
  %v971 = vpop.f32.mrf.mxu0
  %v972 = vadd.f32 0.0, %v971
  %v973 = vpop.f32.mrf.mxu0
  %v974 = vadd.f32 0.0, %v973
  %975 = vdwg.mxu0
  %976 = vmatpush.bf16.msra.mxu0 %v852
  %977 = vmatpush.bf16.msra.mxu0 %v844
  %978 = vmatpush.bf16.msra.mxu0 %v836
  %979 = vmatpush.bf16.msra.mxu0 %v828
  %980 = vmatpush.bf16.msra.mxu0 %v820
  %981 = vmatpush.bf16.msra.mxu0 %v812
  %982 = vmatpush.bf16.msra.mxu0 %v804
  %983 = vmatpush.bf16.msra.mxu0 %v796
  %984 = vmatmul.bf16.gmra.mxu0 %v598
  %v985 = vpop.f32.mrf.mxu0
  %v986 = vadd.f32 0.0, %v985
  %v987 = vpop.f32.mrf.mxu0
  %v988 = vadd.f32 0.0, %v987
  %989 = vdwg.mxu0
  %990 = vmatpush.bf16.msra.mxu0 %v853
  %991 = vmatpush.bf16.msra.mxu0 %v845
  %992 = vmatpush.bf16.msra.mxu0 %v837
  %993 = vmatpush.bf16.msra.mxu0 %v829
  %994 = vmatpush.bf16.msra.mxu0 %v821
  %995 = vmatpush.bf16.msra.mxu0 %v813
  %996 = vmatpush.bf16.msra.mxu0 %v805
  %997 = vmatpush.bf16.msra.mxu0 %v797
  %998 = vmatmul.bf16.gmra.mxu0 %v598
  %v999 = vpop.f32.mrf.mxu0
  %v1000 = vadd.f32 0.0, %v999
  %v1001 = vpop.f32.mrf.mxu0
  %v1002 = vadd.f32 0.0, %v1001
  %1003 = vdwg.mxu0
  %1004 = vmatpush.bf16.msra.mxu0 %v854
  %1005 = vmatpush.bf16.msra.mxu0 %v846
  %1006 = vmatpush.bf16.msra.mxu0 %v838
  %1007 = vmatpush.bf16.msra.mxu0 %v830
  %1008 = vmatpush.bf16.msra.mxu0 %v822
  %1009 = vmatpush.bf16.msra.mxu0 %v814
  %1010 = vmatpush.bf16.msra.mxu0 %v806
  %1011 = vmatpush.bf16.msra.mxu0 %v798
  %1012 = vmatmul.bf16.gmra.mxu0 %v598
  %v1013 = vpop.f32.mrf.mxu0
  %v1014 = vadd.f32 0.0, %v1013
  %v1015 = vpop.f32.mrf.mxu0
  %v1016 = vadd.f32 0.0, %v1015
  %1017 = vdwg.mxu0
  %1018 = vmatpush.bf16.msra.mxu0 %v855
  %1019 = vmatpush.bf16.msra.mxu0 %v847
  %1020 = vmatpush.bf16.msra.mxu0 %v839
  %1021 = vmatpush.bf16.msra.mxu0 %v831
  %1022 = vmatpush.bf16.msra.mxu0 %v823
  %1023 = vmatpush.bf16.msra.mxu0 %v815
  %1024 = vmatpush.bf16.msra.mxu0 %v807
  %1025 = vmatpush.bf16.msra.mxu0 %v799
  %1026 = vmatmul.bf16.gmra.mxu0 %v598
  %v1027 = vpop.f32.mrf.mxu0
  %v1028 = vadd.f32 0.0, %v1027
  %v1029 = vpop.f32.mrf.mxu0
  %v1030 = vadd.f32 0.0, %v1029
  %1031 = vdwg.mxu0
  %v1032 = vmul.f32 %v930, %v523
  %v1033 = vmul.f32 %v944, %v533
  %v1034 = vmul.f32 %v958, %v543
  %v1035 = vmul.f32 %v972, %v553
  %v1036 = vmul.f32 %v986, %v563
  %v1037 = vmul.f32 %v1000, %v573
  %v1038 = vmul.f32 %v1014, %v583
  %v1039 = vmul.f32 %v1028, %v593
  %v1040 = vmul.f32 %v932, %v523
  %v1041 = vmul.f32 %v946, %v533
  %v1042 = vmul.f32 %v960, %v543
  %v1043 = vmul.f32 %v974, %v553
  %v1044 = vmul.f32 %v988, %v563
  %v1045 = vmul.f32 %v1002, %v573
  %v1046 = vmul.f32 %v1016, %v583
  %v1047 = vmul.f32 %v1030, %v593
  %v1048 = vmax.f32 %v1032, -1.0
  %v1049 = vmax.f32 %v1033, -1.0
  %v1050 = vmax.f32 %v1034, -1.0
  %v1051 = vmax.f32 %v1035, -1.0
  %v1052 = vmax.f32 %v1036, -1.0
  %v1053 = vmax.f32 %v1037, -1.0
  %v1054 = vmax.f32 %v1038, -1.0
  %v1055 = vmax.f32 %v1039, -1.0
  %v1056 = vmax.f32 %v1040, -1.0
  %v1057 = vmax.f32 %v1041, -1.0
  %v1058 = vmax.f32 %v1042, -1.0
  %v1059 = vmax.f32 %v1043, -1.0
  %v1060 = vmax.f32 %v1044, -1.0
  %v1061 = vmax.f32 %v1045, -1.0
  %v1062 = vmax.f32 %v1046, -1.0
  %v1063 = vmax.f32 %v1047, -1.0
  %v1064 = vmin.f32 %v1048, 1.0
  %v1065 = vmin.f32 %v1049, 1.0
  %v1066 = vmin.f32 %v1050, 1.0
  %v1067 = vmin.f32 %v1051, 1.0
  %v1068 = vmin.f32 %v1052, 1.0
  %v1069 = vmin.f32 %v1053, 1.0
  %v1070 = vmin.f32 %v1054, 1.0
  %v1071 = vmin.f32 %v1055, 1.0
  %v1072 = vmin.f32 %v1056, 1.0
  %v1073 = vmin.f32 %v1057, 1.0
  %v1074 = vmin.f32 %v1058, 1.0
  %v1075 = vmin.f32 %v1059, 1.0
  %v1076 = vmin.f32 %v1060, 1.0
  %v1077 = vmin.f32 %v1061, 1.0
  %v1078 = vmin.f32 %v1062, 1.0
  %v1079 = vmin.f32 %v1063, 1.0
  %v1080 = vmul.f32 %v1064, %v1064
  %v1081 = vmul.f32 %v1065, %v1065
  %v1082 = vmul.f32 %v1066, %v1066
  %v1083 = vmul.f32 %v1067, %v1067
  %v1084 = vmul.f32 %v1068, %v1068
  %v1085 = vmul.f32 %v1069, %v1069
  %v1086 = vmul.f32 %v1070, %v1070
  %v1087 = vmul.f32 %v1071, %v1071
  %v1088 = vmul.f32 %v1072, %v1072
  %v1089 = vmul.f32 %v1073, %v1073
  %v1090 = vmul.f32 %v1074, %v1074
  %v1091 = vmul.f32 %v1075, %v1075
  %v1092 = vmul.f32 %v1076, %v1076
  %v1093 = vmul.f32 %v1077, %v1077
  %v1094 = vmul.f32 %v1078, %v1078
  %v1095 = vmul.f32 %v1079, %v1079
  %v1096 = vsub.f32 1.0, %v1080
  %v1097 = vsub.f32 1.0, %v1081
  %v1098 = vsub.f32 1.0, %v1082
  %v1099 = vsub.f32 1.0, %v1083
  %v1100 = vsub.f32 1.0, %v1084
  %v1101 = vsub.f32 1.0, %v1085
  %v1102 = vsub.f32 1.0, %v1086
  %v1103 = vsub.f32 1.0, %v1087
  %v1104 = vsub.f32 1.0, %v1088
  %v1105 = vsub.f32 1.0, %v1089
  %v1106 = vsub.f32 1.0, %v1090
  %v1107 = vsub.f32 1.0, %v1091
  %v1108 = vsub.f32 1.0, %v1092
  %v1109 = vsub.f32 1.0, %v1093
  %v1110 = vsub.f32 1.0, %v1094
  %v1111 = vsub.f32 1.0, %v1095
  %v1112 = vmax.f32 %v1096, 0.0
  %v1113 = vmax.f32 %v1097, 0.0
  %v1114 = vmax.f32 %v1098, 0.0
  %v1115 = vmax.f32 %v1099, 0.0
  %v1116 = vmax.f32 %v1100, 0.0
  %v1117 = vmax.f32 %v1101, 0.0
  %v1118 = vmax.f32 %v1102, 0.0
  %v1119 = vmax.f32 %v1103, 0.0
  %v1120 = vmax.f32 %v1104, 0.0
  %v1121 = vmax.f32 %v1105, 0.0
  %v1122 = vmax.f32 %v1106, 0.0
  %v1123 = vmax.f32 %v1107, 0.0
  %v1124 = vmax.f32 %v1108, 0.0
  %v1125 = vmax.f32 %v1109, 0.0
  %v1126 = vmax.f32 %v1110, 0.0
  %v1127 = vmax.f32 %v1111, 0.0
  %v1128 = vrsqrt.pop %v1112
  %v1129 = vmul.f32 %v1128, %v1112
  %v1130 = vmul.f32 %v1129, %v1128
  %v1131 = vmul.f32 0.5, %v1130
  %v1132 = vsub.f32 1.5, %v1131
  %v1133 = vmul.f32 %v1128, %v1132
  %v1134 = vmul.f32 %v1112, %v1133
  %vm1135 = vcmp.eq.f32.partialorder %v1112, inf
  %v1136 = vsel %vm1135, %v1112, %v1134
  %vm1137 = vcmp.eq.f32.partialorder %v1112, 0.0
  %v1138 = vand.u32 %v1112, 2147483648
  %v1139 = vsel %vm1137, %v1138, %v1136
  %v1140 = vrsqrt.pop %v1113
  %v1141 = vmul.f32 %v1140, %v1113
  %v1142 = vmul.f32 %v1141, %v1140
  %v1143 = vmul.f32 0.5, %v1142
  %v1144 = vsub.f32 1.5, %v1143
  %v1145 = vmul.f32 %v1140, %v1144
  %v1146 = vmul.f32 %v1113, %v1145
  %vm1147 = vcmp.eq.f32.partialorder %v1113, inf
  %v1148 = vsel %vm1147, %v1113, %v1146
  %vm1149 = vcmp.eq.f32.partialorder %v1113, 0.0
  %v1150 = vand.u32 %v1113, 2147483648
  %v1151 = vsel %vm1149, %v1150, %v1148
  %v1152 = vrsqrt.pop %v1114
  %v1153 = vmul.f32 %v1152, %v1114
  %v1154 = vmul.f32 %v1153, %v1152
  %v1155 = vmul.f32 0.5, %v1154
  %v1156 = vsub.f32 1.5, %v1155
  %v1157 = vmul.f32 %v1152, %v1156
  %v1158 = vmul.f32 %v1114, %v1157
  %vm1159 = vcmp.eq.f32.partialorder %v1114, inf
  %v1160 = vsel %vm1159, %v1114, %v1158
  %vm1161 = vcmp.eq.f32.partialorder %v1114, 0.0
  %v1162 = vand.u32 %v1114, 2147483648
  %v1163 = vsel %vm1161, %v1162, %v1160
  %v1164 = vrsqrt.pop %v1115
  %v1165 = vmul.f32 %v1164, %v1115
  %v1166 = vmul.f32 %v1165, %v1164
  %v1167 = vmul.f32 0.5, %v1166
  %v1168 = vsub.f32 1.5, %v1167
  %v1169 = vmul.f32 %v1164, %v1168
  %v1170 = vmul.f32 %v1115, %v1169
  %vm1171 = vcmp.eq.f32.partialorder %v1115, inf
  %v1172 = vsel %vm1171, %v1115, %v1170
  %vm1173 = vcmp.eq.f32.partialorder %v1115, 0.0
  %v1174 = vand.u32 %v1115, 2147483648
  %v1175 = vsel %vm1173, %v1174, %v1172
  %v1176 = vrsqrt.pop %v1116
  %v1177 = vmul.f32 %v1176, %v1116
  %v1178 = vmul.f32 %v1177, %v1176
  %v1179 = vmul.f32 0.5, %v1178
  %v1180 = vsub.f32 1.5, %v1179
  %v1181 = vmul.f32 %v1176, %v1180
  %v1182 = vmul.f32 %v1116, %v1181
  %vm1183 = vcmp.eq.f32.partialorder %v1116, inf
  %v1184 = vsel %vm1183, %v1116, %v1182
  %vm1185 = vcmp.eq.f32.partialorder %v1116, 0.0
  %v1186 = vand.u32 %v1116, 2147483648
  %v1187 = vsel %vm1185, %v1186, %v1184
  %v1188 = vrsqrt.pop %v1117
  %v1189 = vmul.f32 %v1188, %v1117
  %v1190 = vmul.f32 %v1189, %v1188
  %v1191 = vmul.f32 0.5, %v1190
  %v1192 = vsub.f32 1.5, %v1191
  %v1193 = vmul.f32 %v1188, %v1192
  %v1194 = vmul.f32 %v1117, %v1193
  %vm1195 = vcmp.eq.f32.partialorder %v1117, inf
  %v1196 = vsel %vm1195, %v1117, %v1194
  %vm1197 = vcmp.eq.f32.partialorder %v1117, 0.0
  %v1198 = vand.u32 %v1117, 2147483648
  %v1199 = vsel %vm1197, %v1198, %v1196
  %v1200 = vrsqrt.pop %v1118
  %v1201 = vmul.f32 %v1200, %v1118
  %v1202 = vmul.f32 %v1201, %v1200
  %v1203 = vmul.f32 0.5, %v1202
  %v1204 = vsub.f32 1.5, %v1203
  %v1205 = vmul.f32 %v1200, %v1204
  %v1206 = vmul.f32 %v1118, %v1205
  %vm1207 = vcmp.eq.f32.partialorder %v1118, inf
  %v1208 = vsel %vm1207, %v1118, %v1206
  %vm1209 = vcmp.eq.f32.partialorder %v1118, 0.0
  %v1210 = vand.u32 %v1118, 2147483648
  %v1211 = vsel %vm1209, %v1210, %v1208
  %v1212 = vrsqrt.pop %v1119
  %v1213 = vmul.f32 %v1212, %v1119
  %v1214 = vmul.f32 %v1213, %v1212
  %v1215 = vmul.f32 0.5, %v1214
  %v1216 = vsub.f32 1.5, %v1215
  %v1217 = vmul.f32 %v1212, %v1216
  %v1218 = vmul.f32 %v1119, %v1217
  %vm1219 = vcmp.eq.f32.partialorder %v1119, inf
  %v1220 = vsel %vm1219, %v1119, %v1218
  %vm1221 = vcmp.eq.f32.partialorder %v1119, 0.0
  %v1222 = vand.u32 %v1119, 2147483648
  %v1223 = vsel %vm1221, %v1222, %v1220
  %v1224 = vrsqrt.pop %v1120
  %v1225 = vmul.f32 %v1224, %v1120
  %v1226 = vmul.f32 %v1225, %v1224
  %v1227 = vmul.f32 0.5, %v1226
  %v1228 = vsub.f32 1.5, %v1227
  %v1229 = vmul.f32 %v1224, %v1228
  %v1230 = vmul.f32 %v1120, %v1229
  %vm1231 = vcmp.eq.f32.partialorder %v1120, inf
  %v1232 = vsel %vm1231, %v1120, %v1230
  %vm1233 = vcmp.eq.f32.partialorder %v1120, 0.0
  %v1234 = vand.u32 %v1120, 2147483648
  %v1235 = vsel %vm1233, %v1234, %v1232
  %v1236 = vrsqrt.pop %v1121
  %v1237 = vmul.f32 %v1236, %v1121
  %v1238 = vmul.f32 %v1237, %v1236
  %v1239 = vmul.f32 0.5, %v1238
  %v1240 = vsub.f32 1.5, %v1239
  %v1241 = vmul.f32 %v1236, %v1240
  %v1242 = vmul.f32 %v1121, %v1241
  %vm1243 = vcmp.eq.f32.partialorder %v1121, inf
  %v1244 = vsel %vm1243, %v1121, %v1242
  %vm1245 = vcmp.eq.f32.partialorder %v1121, 0.0
  %v1246 = vand.u32 %v1121, 2147483648
  %v1247 = vsel %vm1245, %v1246, %v1244
  %v1248 = vrsqrt.pop %v1122
  %v1249 = vmul.f32 %v1248, %v1122
  %v1250 = vmul.f32 %v1249, %v1248
  %v1251 = vmul.f32 0.5, %v1250
  %v1252 = vsub.f32 1.5, %v1251
  %v1253 = vmul.f32 %v1248, %v1252
  %v1254 = vmul.f32 %v1122, %v1253
  %vm1255 = vcmp.eq.f32.partialorder %v1122, inf
  %v1256 = vsel %vm1255, %v1122, %v1254
  %vm1257 = vcmp.eq.f32.partialorder %v1122, 0.0
  %v1258 = vand.u32 %v1122, 2147483648
  %v1259 = vsel %vm1257, %v1258, %v1256
  %v1260 = vrsqrt.pop %v1123
  %v1261 = vmul.f32 %v1260, %v1123
  %v1262 = vmul.f32 %v1261, %v1260
  %v1263 = vmul.f32 0.5, %v1262
  %v1264 = vsub.f32 1.5, %v1263
  %v1265 = vmul.f32 %v1260, %v1264
  %v1266 = vmul.f32 %v1123, %v1265
  %vm1267 = vcmp.eq.f32.partialorder %v1123, inf
  %v1268 = vsel %vm1267, %v1123, %v1266
  %vm1269 = vcmp.eq.f32.partialorder %v1123, 0.0
  %v1270 = vand.u32 %v1123, 2147483648
  %v1271 = vsel %vm1269, %v1270, %v1268
  %v1272 = vrsqrt.pop %v1124
  %v1273 = vmul.f32 %v1272, %v1124
  %v1274 = vmul.f32 %v1273, %v1272
  %v1275 = vmul.f32 0.5, %v1274
  %v1276 = vsub.f32 1.5, %v1275
  %v1277 = vmul.f32 %v1272, %v1276
  %v1278 = vmul.f32 %v1124, %v1277
  %vm1279 = vcmp.eq.f32.partialorder %v1124, inf
  %v1280 = vsel %vm1279, %v1124, %v1278
  %vm1281 = vcmp.eq.f32.partialorder %v1124, 0.0
  %v1282 = vand.u32 %v1124, 2147483648
  %v1283 = vsel %vm1281, %v1282, %v1280
  %v1284 = vrsqrt.pop %v1125
  %v1285 = vmul.f32 %v1284, %v1125
  %v1286 = vmul.f32 %v1285, %v1284
  %v1287 = vmul.f32 0.5, %v1286
  %v1288 = vsub.f32 1.5, %v1287
  %v1289 = vmul.f32 %v1284, %v1288
  %v1290 = vmul.f32 %v1125, %v1289
  %vm1291 = vcmp.eq.f32.partialorder %v1125, inf
  %v1292 = vsel %vm1291, %v1125, %v1290
  %vm1293 = vcmp.eq.f32.partialorder %v1125, 0.0
  %v1294 = vand.u32 %v1125, 2147483648
  %v1295 = vsel %vm1293, %v1294, %v1292
  %v1296 = vrsqrt.pop %v1126
  %v1297 = vmul.f32 %v1296, %v1126
  %v1298 = vmul.f32 %v1297, %v1296
  %v1299 = vmul.f32 0.5, %v1298
  %v1300 = vsub.f32 1.5, %v1299
  %v1301 = vmul.f32 %v1296, %v1300
  %v1302 = vmul.f32 %v1126, %v1301
  %vm1303 = vcmp.eq.f32.partialorder %v1126, inf
  %v1304 = vsel %vm1303, %v1126, %v1302
  %vm1305 = vcmp.eq.f32.partialorder %v1126, 0.0
  %v1306 = vand.u32 %v1126, 2147483648
  %v1307 = vsel %vm1305, %v1306, %v1304
  %v1308 = vrsqrt.pop %v1127
  %v1309 = vmul.f32 %v1308, %v1127
  %v1310 = vmul.f32 %v1309, %v1308
  %v1311 = vmul.f32 0.5, %v1310
  %v1312 = vsub.f32 1.5, %v1311
  %v1313 = vmul.f32 %v1308, %v1312
  %v1314 = vmul.f32 %v1127, %v1313
  %vm1315 = vcmp.eq.f32.partialorder %v1127, inf
  %v1316 = vsel %vm1315, %v1127, %v1314
  %vm1317 = vcmp.eq.f32.partialorder %v1127, 0.0
  %v1318 = vand.u32 %v1127, 2147483648
  %v1319 = vsel %vm1317, %v1318, %v1316
  %v1320 = vld [vmem:[%s1] sm:$0xff]
  %v1321 = vld [vmem:[%s1 + $0x8] sm:$0xff]
  %1323 = vset.pattern.permute.xlu0 1
  %1324 = vperm.xlu0 %1323, %v1320
  %v1325 = vpop.permute.xlu0 %1324
  %1328 = vset.pattern.permute.xlu0 1
  %1329 = vperm.xlu0 %1328, %v1321
  %v1330 = vpop.permute.xlu0 %1329
  %v1332 = vmul.f32 %v1064, %v1325
  %v1333 = vmul.f32 %v1065, %v1325
  %v1334 = vmul.f32 %v1066, %v1325
  %v1335 = vmul.f32 %v1067, %v1325
  %v1336 = vmul.f32 %v1068, %v1325
  %v1337 = vmul.f32 %v1069, %v1325
  %v1338 = vmul.f32 %v1070, %v1325
  %v1339 = vmul.f32 %v1071, %v1325
  %v1340 = vmul.f32 %v1072, %v1330
  %v1341 = vmul.f32 %v1073, %v1330
  %v1342 = vmul.f32 %v1074, %v1330
  %v1343 = vmul.f32 %v1075, %v1330
  %v1344 = vmul.f32 %v1076, %v1330
  %v1345 = vmul.f32 %v1077, %v1330
  %v1346 = vmul.f32 %v1078, %v1330
  %v1347 = vmul.f32 %v1079, %v1330
  %1348 = vset.pattern.permute.xlu0 2
  %1349 = vperm.xlu0 %1348, %v1320
  %v1350 = vpop.permute.xlu0 %1349
  %1352 = vset.pattern.permute.xlu0 2
  %1353 = vperm.xlu0 %1352, %v1321
  %v1354 = vpop.permute.xlu0 %1353
  %v1356 = vmul.f32 %v1139, %v1350
  %v1357 = vmul.f32 %v1151, %v1350
  %v1358 = vmul.f32 %v1163, %v1350
  %v1359 = vmul.f32 %v1175, %v1350
  %v1360 = vmul.f32 %v1187, %v1350
  %v1361 = vmul.f32 %v1199, %v1350
  %v1362 = vmul.f32 %v1211, %v1350
  %v1363 = vmul.f32 %v1223, %v1350
  %v1364 = vmul.f32 %v1235, %v1354
  %v1365 = vmul.f32 %v1247, %v1354
  %v1366 = vmul.f32 %v1259, %v1354
  %v1367 = vmul.f32 %v1271, %v1354
  %v1368 = vmul.f32 %v1283, %v1354
  %v1369 = vmul.f32 %v1295, %v1354
  %v1370 = vmul.f32 %v1307, %v1354
  %v1371 = vmul.f32 %v1319, %v1354
  %v1372 = vsub.f32 %v1332, %v1356
  %v1373 = vsub.f32 %v1333, %v1357
  %v1374 = vsub.f32 %v1334, %v1358
  %v1375 = vsub.f32 %v1335, %v1359
  %v1376 = vsub.f32 %v1336, %v1360
  %v1377 = vsub.f32 %v1337, %v1361
  %v1378 = vsub.f32 %v1338, %v1362
  %v1379 = vsub.f32 %v1339, %v1363
  %v1380 = vsub.f32 %v1340, %v1364
  %v1381 = vsub.f32 %v1341, %v1365
  %v1382 = vsub.f32 %v1342, %v1366
  %v1383 = vsub.f32 %v1343, %v1367
  %v1384 = vsub.f32 %v1344, %v1368
  %v1385 = vsub.f32 %v1345, %v1369
  %v1386 = vsub.f32 %v1346, %v1370
  %v1387 = vsub.f32 %v1347, %v1371
  %vm1388 = vcmp.gt.f32.partialorder %v1064, 0.0
  %vm1389 = vcmp.gt.f32.partialorder %v1065, 0.0
  %vm1390 = vcmp.gt.f32.partialorder %v1066, 0.0
  %vm1391 = vcmp.gt.f32.partialorder %v1067, 0.0
  %vm1392 = vcmp.gt.f32.partialorder %v1068, 0.0
  %vm1393 = vcmp.gt.f32.partialorder %v1069, 0.0
  %vm1394 = vcmp.gt.f32.partialorder %v1070, 0.0
  %vm1395 = vcmp.gt.f32.partialorder %v1071, 0.0
  %vm1396 = vcmp.gt.f32.partialorder %v1072, 0.0
  %vm1397 = vcmp.gt.f32.partialorder %v1073, 0.0
  %vm1398 = vcmp.gt.f32.partialorder %v1074, 0.0
  %vm1399 = vcmp.gt.f32.partialorder %v1075, 0.0
  %vm1400 = vcmp.gt.f32.partialorder %v1076, 0.0
  %vm1401 = vcmp.gt.f32.partialorder %v1077, 0.0
  %vm1402 = vcmp.gt.f32.partialorder %v1078, 0.0
  %vm1403 = vcmp.gt.f32.partialorder %v1079, 0.0
  %v1404 = vsel %vm1388, %v1372, %v1064
  %v1405 = vsel %vm1389, %v1373, %v1065
  %v1406 = vsel %vm1390, %v1374, %v1066
  %v1407 = vsel %vm1391, %v1375, %v1067
  %v1408 = vsel %vm1392, %v1376, %v1068
  %v1409 = vsel %vm1393, %v1377, %v1069
  %v1410 = vsel %vm1394, %v1378, %v1070
  %v1411 = vsel %vm1395, %v1379, %v1071
  %v1412 = vsel %vm1396, %v1380, %v1072
  %v1413 = vsel %vm1397, %v1381, %v1073
  %v1414 = vsel %vm1398, %v1382, %v1074
  %v1415 = vsel %vm1399, %v1383, %v1075
  %v1416 = vsel %vm1400, %v1384, %v1076
  %v1417 = vsel %vm1401, %v1385, %v1077
  %v1418 = vsel %vm1402, %v1386, %v1078
  %v1419 = vsel %vm1403, %v1387, %v1079
  %v1420 = vmul.f32 %v1064, 64.0
  %v1421 = vmul.f32 %v1065, 64.0
  %v1422 = vmul.f32 %v1066, 64.0
  %v1423 = vmul.f32 %v1067, 64.0
  %v1424 = vmul.f32 %v1068, 64.0
  %v1425 = vmul.f32 %v1069, 64.0
  %v1426 = vmul.f32 %v1070, 64.0
  %v1427 = vmul.f32 %v1071, 64.0
  %v1428 = vmul.f32 %v1072, 64.0
  %v1429 = vmul.f32 %v1073, 64.0
  %v1430 = vmul.f32 %v1074, 64.0
  %v1431 = vmul.f32 %v1075, 64.0
  %v1432 = vmul.f32 %v1076, 64.0
  %v1433 = vmul.f32 %v1077, 64.0
  %v1434 = vmul.f32 %v1078, 64.0
  %v1435 = vmul.f32 %v1079, 64.0
  %1436 = vst [vmem:[%s3] sm:$0xff] %v1420
  %1437 = vst [vmem:[%s3 + $0x8] sm:$0xff] %v1421
  %1438 = vst [vmem:[%s3 + $0x10] sm:$0xff] %v1422
  %1439 = vst [vmem:[%s3 + $0x18] sm:$0xff] %v1423
  %1440 = vst [vmem:[%s3 + $0x20] sm:$0xff] %v1424
  %1441 = vst [vmem:[%s3 + $0x28] sm:$0xff] %v1425
  %1442 = vst [vmem:[%s3 + $0x30] sm:$0xff] %v1426
  %1443 = vst [vmem:[%s3 + $0x38] sm:$0xff] %v1427
  %1444 = vst [vmem:[%s3 + $0x40] sm:$0xff] %v1428
  %1445 = vst [vmem:[%s3 + $0x48] sm:$0xff] %v1429
  %1446 = vst [vmem:[%s3 + $0x50] sm:$0xff] %v1430
  %1447 = vst [vmem:[%s3 + $0x58] sm:$0xff] %v1431
  %1448 = vst [vmem:[%s3 + $0x60] sm:$0xff] %v1432
  %1449 = vst [vmem:[%s3 + $0x68] sm:$0xff] %v1433
  %1450 = vst [vmem:[%s3 + $0x70] sm:$0xff] %v1434
  %1451 = vst [vmem:[%s3 + $0x78] sm:$0xff] %v1435
  %v1452 = vmul.f32 %v1404, 64.0
  %v1453 = vmul.f32 %v1405, 64.0
  %v1454 = vmul.f32 %v1406, 64.0
  %v1455 = vmul.f32 %v1407, 64.0
  %v1456 = vmul.f32 %v1408, 64.0
  %v1457 = vmul.f32 %v1409, 64.0
  %v1458 = vmul.f32 %v1410, 64.0
  %v1459 = vmul.f32 %v1411, 64.0
  %v1460 = vmul.f32 %v1412, 64.0
  %v1461 = vmul.f32 %v1413, 64.0
  %v1462 = vmul.f32 %v1414, 64.0
  %v1463 = vmul.f32 %v1415, 64.0
  %v1464 = vmul.f32 %v1416, 64.0
  %v1465 = vmul.f32 %v1417, 64.0
  %v1466 = vmul.f32 %v1418, 64.0
  %v1467 = vmul.f32 %v1419, 64.0
  %1468 = vst [vmem:[%s4] sm:$0xff] %v1452
  %1469 = vst [vmem:[%s4 + $0x8] sm:$0xff] %v1453
  %1470 = vst [vmem:[%s4 + $0x10] sm:$0xff] %v1454
  %1471 = vst [vmem:[%s4 + $0x18] sm:$0xff] %v1455
  %1472 = vst [vmem:[%s4 + $0x20] sm:$0xff] %v1456
  %1473 = vst [vmem:[%s4 + $0x28] sm:$0xff] %v1457
  %1474 = vst [vmem:[%s4 + $0x30] sm:$0xff] %v1458
  %1475 = vst [vmem:[%s4 + $0x38] sm:$0xff] %v1459
  %1476 = vst [vmem:[%s4 + $0x40] sm:$0xff] %v1460
  %1477 = vst [vmem:[%s4 + $0x48] sm:$0xff] %v1461
  %1478 = vst [vmem:[%s4 + $0x50] sm:$0xff] %v1462
  %1479 = vst [vmem:[%s4 + $0x58] sm:$0xff] %v1463
  %1480 = vst [vmem:[%s4 + $0x60] sm:$0xff] %v1464
  %1481 = vst [vmem:[%s4 + $0x68] sm:$0xff] %v1465
  %1482 = vst [vmem:[%s4 + $0x70] sm:$0xff] %v1466
  %1483 = vst [vmem:[%s4 + $0x78] sm:$0xff] %v1467
  // Predicated region
  $region14: #{magface_forward.3} parent=0 // pred_check
    _
  $region15: #{magface_forward.3} parent=0 // pred_check_branch
    %1485 = sbr.rel (0) target = $region17
  $region16: #{magface_forward.3} parent=0 // pred_region
    _
  $region17: #{magface_forward.3} parent=0 // pred_fallthru
    _
  // Predicated region
  $region18: #{magface_forward.3} parent=0 // pred_check
    _
  $region19: #{magface_forward.3} parent=0 // pred_check_branch
    %1487 = sbr.rel (0) target = $region21
  $region20: #{magface_forward.3} parent=0 // pred_region
    _
  $region21: #{magface_forward.3} parent=0 // pred_fallthru
    _
  // Predicated region
  $region22: #{magface_forward.3} parent=0 // pred_check
    _
  $region23: #{magface_forward.3} parent=0 // pred_check_branch
    %1489 = sbr.rel (0) target = $region25
  $region24: #{magface_forward.3} parent=0 // pred_region
    _
  $region25: #{magface_forward.3} parent=0 // pred_fallthru
    _
  // Predicated region
  $region26: #{magface_forward.3} parent=0 // pred_check
    _
  $region27: #{magface_forward.3} parent=0 // pred_check_branch
    %1491 = sbr.rel (0) target = $region29
  $region28: #{magface_forward.3} parent=0 // pred_region
    _
  $region29: #{magface_forward.3} parent=0 // pred_fallthru
    _

</llo_original>
